<compile_context>
chip_gen: v7x
topology: tpu7x:2x2x1
jax: 0.10.0
libtpu: 0.0.40
codegen_flags: <defaults>
</compile_context>

<pallas_src>
import jax
import jax.numpy as jnp
from jax.experimental import pallas as pl
from jax.experimental.pallas import tpu as pltpu

LANE = 128
SUBLANE = 8
NEG = -1e30      # bias for padded class lanes (drops them out of log_softmax)


def _round_up(x, m):
    return ((x + m - 1) // m) * m


# ------------------------------- fused kernel --------------------------------
def _make_kernel(num_layers, T, Bp, H, Hp):
    """LSTM recurrence (layer wavefront) + FC + log_softmax, fully VMEM resident."""

    def kernel(*refs):
        xp0_ref = refs[0]                         # (T*Bp, Gp) f32: emb@W_ih0+b0, time-major
        whh_refs = [refs[1]]
        wih_refs = [None]
        b_refs = [None]
        idx = 2
        for _ in range(1, num_layers):
            wih_refs.append(refs[idx])
            whh_refs.append(refs[idx + 1])
            b_refs.append(refs[idx + 2])
            idx += 3
        fc_w_ref, fc_b_ref, out_ref = refs[idx], refs[idx + 1], refs[idx + 2]

        xp0 = xp0_ref[...]                                     # (T*Bp, Gp) f32
        w_hh = [r[...] for r in whh_refs]                      # (Hp, Gp) bf16
        w_ih = [None] + [r[...] for r in wih_refs[1:]]         # (Hp, Gp) bf16
        b = [None] + [r[...] for r in b_refs[1:]]              # (1, Gp)  f32
        fc_w = fc_w_ref[...]                                   # (Hp, Cp) bf16
        fc_b = fc_b_ref[...]                                   # (1, Cp)  f32 (pad lanes = NEG)

        # Hoisted zero pad block used to rebuild the 128-lane-wide h each step.
        zpad = jnp.zeros((Bp, Hp - H), jnp.float32) if Hp > H else None

        def cell(pre, c_prev):
            # Packed gate order (i, f, o, g): one sigmoid over 3 blocks, one tanh.
            sig = jax.nn.sigmoid(pre[:, :3 * H])
            i_g, f_g, o_g = sig[:, :H], sig[:, H:2 * H], sig[:, 2 * H:3 * H]
            g_g = jnp.tanh(pre[:, 3 * H:4 * H])
            c_new = f_g * c_prev + i_g * g_g                   # f32 cell state
            h_new = o_g * jnp.tanh(c_new)                      # (Bp, H) f32
            if zpad is not None:
                h_new = jnp.concatenate([h_new, zpad], axis=-1)  # (Bp, Hp) f32
            return h_new, c_new

        # bf16 copies of h feed the MXU; c and the f32 h stay in f32.
        h = [jnp.zeros((Bp, Hp), jnp.bfloat16) for _ in range(num_layers)]
        c = [jnp.zeros((Bp, H), jnp.float32) for _ in range(num_layers)]
        hs_last = []

        # Wavefront over (t, layer); T is small so the loop is statically unrolled.
        for t in range(T):
            pre = xp0[t * Bp:(t + 1) * Bp, :] + jnp.dot(
                h[0], w_hh[0], preferred_element_type=jnp.float32)
            h_f32, c[0] = cell(pre, c[0])
            h[0] = h_f32.astype(jnp.bfloat16)
            for l in range(1, num_layers):
                pre = (jnp.dot(h[l - 1], w_ih[l], preferred_element_type=jnp.float32)
                       + b[l]
                       + jnp.dot(h[l], w_hh[l], preferred_element_type=jnp.float32))
                h_f32, c[l] = cell(pre, c[l])
                h[l] = h_f32.astype(jnp.bfloat16)
            hs_last.append(h_f32)                              # last layer's h_t (f32)

        # ---- Epilogue, hoisted out of the t loop. Dropout(p=0.2) is identity in eval.
        hseq = jnp.concatenate(hs_last, axis=0).astype(jnp.bfloat16)   # (T*Bp, Hp)
        logits = jnp.dot(hseq, fc_w, preferred_element_type=jnp.float32) + fc_b
        m = jnp.max(logits, axis=-1, keepdims=True)
        z = logits - m
        lse = jnp.log(jnp.sum(jnp.exp(z), axis=-1, keepdims=True))
        out_ref[...] = z - lse                                 # one lane-dense, unmasked store

    return kernel


def _full_spec(shape):
    nd = len(shape)
    return pl.BlockSpec(shape, lambda i, _nd=nd: (0,) * _nd)


def lstm_classifier_forward(packed, word, *, hidden_dim, n_classes):
    """word: (B, T) int token ids -> (B, T, n_classes) log-probabilities."""
    B, T = word.shape
    H = hidden_dim
    Hp, Gp = packed["w_hh"][0].shape
    Cp = packed["fc_w"].shape[1]
    num_layers = len(packed["w_hh"])
    Bp = max(SUBLANE, _round_up(B, SUBLANE))

    # Embedding + layer-0 input projection (+bias) fused at pack time into `table`;
    # gather rows in time-major order (row r = t*Bp + b).  Padded batch rows use
    # token 0; they never mix with real rows and are dropped at the final slice.
    ids = jnp.zeros((T, Bp), jnp.int32).at[:, :B].set(word.T.astype(jnp.int32))
    xp0 = packed["table"][ids.reshape(T * Bp)]                 # (T*Bp, Gp) f32

    args = [xp0, packed["w_hh"][0]]
    for l in range(1, num_layers):
        args += [packed["w_ih"][l], packed["w_hh"][l], packed["b"][l]]
    args += [packed["fc_w"], packed["fc_b"]]

    out = pl.pallas_call(
        _make_kernel(num_layers, T, Bp, H, Hp),
        out_shape=jax.ShapeDtypeStruct((T * Bp, Cp), jnp.float32),
        grid=(1,),                                             # single fused invocation
        in_specs=[_full_spec(a.shape) for a in args],
        out_specs=_full_spec((T * Bp, Cp)),
        compiler_params=pltpu.CompilerParams(dimension_semantics=("arbitrary",)),
    )(*args)

    # Lane-dense (T*Bp, Cp) slab -> (B, T, C): wrapper-side layout plumbing only.
    return out.reshape(T, Bp, Cp)[:, :B, :n_classes].transpose(1, 0, 2)


# ------------------------------- parameters ----------------------------------
def init_raw_params(key, embedding_dim, hidden_dim, letter_size, n_classes,
                    padding_idx, num_layers):
    """Raw PyTorch-layout parameters (same init distributions as the nn.Module)."""
    keys = list(jax.random.split(key, 3 + 4 * num_layers))
    k = hidden_dim ** -0.5
    emb = jax.random.normal(keys.pop(0), (letter_size, embedding_dim), jnp.float32)
    emb = emb.at[padding_idx].set(0.0)
    layers = []
    for l in range(num_layers):
        in_dim = embedding_dim if l == 0 else hidden_dim
        layers.append(dict(
            w_ih=jax.random.uniform(keys.pop(0), (4 * hidden_dim, in_dim), jnp.float32, -k, k),
            w_hh=jax.random.uniform(keys.pop(0), (4 * hidden_dim, hidden_dim), jnp.float32, -k, k),
            b_ih=jax.random.uniform(keys.pop(0), (4 * hidden_dim,), jnp.float32, -k, k),
            b_hh=jax.random.uniform(keys.pop(0), (4 * hidden_dim,), jnp.float32, -k, k)))
    fc_w = jax.random.uniform(keys.pop(0), (n_classes, hidden_dim), jnp.float32, -k, k)
    fc_b = jax.random.uniform(keys.pop(0), (n_classes,), jnp.float32, -k, k)
    return dict(embedding=emb, lstm=layers, fc_w=fc_w, fc_b=fc_b, hidden_dim=hidden_dim)


def pack_params(raw):
    """Repack PyTorch-layout weights for the kernel:
      * 4 gates packed into one lane block, packed order (i, f, o, g),
      * weights pre-transposed; hidden/contracting rows zero-padded to 128,
      * embedding fused with layer-0's W_ih/bias into a (V, Gp) f32 table,
      * MXU operands stored in bf16; biases/table kept f32,
      * fc bias padded with -1e30 so padded class lanes drop out of log_softmax.
    """
    H = raw["hidden_dim"]
    Hp = _round_up(H, LANE)
    Gp = _round_up(4 * H, LANE)
    order = (0, 1, 3, 2)                      # pytorch (i,f,g,o) -> packed (i,f,o,g)

    def pack_w(w, rows):                      # (4H, K) -> (rows, Gp), transposed
        K = w.shape[1]
        out = jnp.zeros((rows, Gp), jnp.float32)
        for s, g in enumerate(order):
            out = out.at[:K, s * H:(s + 1) * H].set(w[g * H:(g + 1) * H, :].T)
        return out

    def pack_b(b_ih, b_hh):                   # (4H,) -> (1, Gp)
        bsum = b_ih + b_hh
        out = jnp.zeros((1, Gp), jnp.float32)
        for s, g in enumerate(order):
            out = out.at[0, s * H:(s + 1) * H].set(bsum[g * H:(g + 1) * H])
        return out

    lay0 = raw["lstm"][0]
    E = lay0["w_ih"].shape[1]
    w_ih0 = pack_w(lay0["w_ih"], E)                                        # (E, Gp) f32
    table = raw["embedding"] @ w_ih0 + pack_b(lay0["b_ih"], lay0["b_hh"])  # (V, Gp) f32

    w_hh = [pack_w(l["w_hh"], Hp).astype(jnp.bfloat16) for l in raw["lstm"]]
    w_ih = [None] + [pack_w(l["w_ih"], Hp).astype(jnp.bfloat16) for l in raw["lstm"][1:]]
    b = [None] + [pack_b(l["b_ih"], l["b_hh"]) for l in raw["lstm"][1:]]

    C = raw["fc_w"].shape[0]
    Cp = _round_up(C, LANE)
    fc_w = (jnp.zeros((Hp, Cp), jnp.float32).at[:H, :C]
            .set(raw["fc_w"].T).astype(jnp.bfloat16))
    fc_b = jnp.full((1, Cp), NEG, jnp.float32).at[0, :C].set(raw["fc_b"])
    return dict(table=table, w_hh=w_hh, w_ih=w_ih, b=b, fc_w=fc_w, fc_b=fc_b)


# ------------------------- pure-JAX reference (check) -------------------------
def reference_forward(raw, word):
    H = raw["hidden_dim"]
    x = raw["embedding"][word]                   # (B, T, E)
    B, T, _ = x.shape
    for lay in raw["lstm"]:
        h = jnp.zeros((B, H), jnp.float32)
        c = jnp.zeros((B, H), jnp.float32)
        hs = []
        for t in range(T):
            gates = (x[:, t, :] @ lay["w_ih"].T + lay["b_ih"]
                     + h @ lay["w_hh"].T + lay["b_hh"])
            i, f, g, o = jnp.split(gates, 4, axis=-1)
            c = jax.nn.sigmoid(f) * c + jax.nn.sigmoid(i) * jnp.tanh(g)
            h = jax.nn.sigmoid(o) * jnp.tanh(c)
            hs.append(h)
        x = jnp.stack(hs, axis=1)                # (B, T, H)
    logits = x @ raw["fc_w"].T + raw["fc_b"]
    return jax.nn.log_softmax(logits, axis=-1)


# ----------------------------------- main -------------------------------------
if __name__ == "__main__":
    embedding_dim = 32
    hidden_dim = 32
    letter_size = 20
    n_classes = 5
    padding_idx = 0
    num_layers = 2
    B, T = 2, 8

    root = jax.random.PRNGKey(0)
    k_params, k_words = jax.random.split(root)
    raw = init_raw_params(k_params, embedding_dim, hidden_dim, letter_size,
                          n_classes, padding_idx, num_layers)
    packed = pack_params(raw)
    word = jax.random.randint(k_words, (B, T), 0, letter_size, dtype=jnp.int32)

    fwd = jax.jit(lstm_classifier_forward, static_argnames=("hidden_dim", "n_classes"))
    out = jax.block_until_ready(fwd(packed, word, hidden_dim=hidden_dim,
                                    n_classes=n_classes))

    assert out.shape == (B, T, n_classes)
    # log_softmax rows must exponentiate-sum to 1 (padded class lanes underflow to 0)
    assert bool(jnp.allclose(jnp.exp(out).sum(axis=2), 1.0, atol=1e-4))

    # Cross-check against a pure-f32 JAX implementation of the PyTorch forward().
    with jax.default_matmul_precision("float32"):
        ref = reference_forward(raw, word)
    # bf16 MXU operands with f32 accumulation (per perf review) -> slightly looser tol.
    assert bool(jnp.allclose(out, ref, atol=2e-2, rtol=2e-2)), \
        float(jnp.max(jnp.abs(out - ref)))

    print("KERNEL_OK")
</pallas_src>

<mosaic_0001>
module attributes {stable_mosaic.version = 11 : i64} {
  func.func @kernel(%arg0: i32, %arg1: memref<64x128xf32, #tpu.memory_space<vmem>>, %arg2: memref<128x128xbf16, #tpu.memory_space<vmem>>, %arg3: memref<128x128xbf16, #tpu.memory_space<vmem>>, %arg4: memref<128x128xbf16, #tpu.memory_space<vmem>>, %arg5: memref<1x128xf32, #tpu.memory_space<vmem>>, %arg6: memref<128x128xbf16, #tpu.memory_space<vmem>>, %arg7: memref<1x128xf32, #tpu.memory_space<vmem>>, %arg8: memref<64x128xf32, #tpu.memory_space<vmem>>) attributes {dimension_semantics = [#tpu.dimension_semantics<arbitrary>], iteration_bounds = array<i64: 1>, scalar_prefetch = 0 : i64, scratch_operands = 0 : i64, tpu.core_type = #tpu.core_type<tc>, window_params = [{pipeline_mode = #tpu.pipeline_mode<synchronous>, transform_indices = @transform_0, window_bounds = array<i64: 64, 128>}, {pipeline_mode = #tpu.pipeline_mode<synchronous>, transform_indices = @transform_1, window_bounds = array<i64: 128, 128>}, {pipeline_mode = #tpu.pipeline_mode<synchronous>, transform_indices = @transform_2, window_bounds = array<i64: 128, 128>}, {pipeline_mode = #tpu.pipeline_mode<synchronous>, transform_indices = @transform_3, window_bounds = array<i64: 128, 128>}, {pipeline_mode = #tpu.pipeline_mode<synchronous>, transform_indices = @transform_4, window_bounds = array<i64: 1, 128>}, {pipeline_mode = #tpu.pipeline_mode<synchronous>, transform_indices = @transform_5, window_bounds = array<i64: 128, 128>}, {pipeline_mode = #tpu.pipeline_mode<synchronous>, transform_indices = @transform_6, window_bounds = array<i64: 1, 128>}, {pipeline_mode = #tpu.pipeline_mode<synchronous>, transform_indices = @transform_7, window_bounds = array<i64: 64, 128>}]} {
    %c0 = arith.constant 0 : index
    %c0_0 = arith.constant 0 : index
    %0 = vector.load %arg1[%c0, %c0_0] : memref<64x128xf32, #tpu.memory_space<vmem>>, vector<64x128xf32>
    %c0_1 = arith.constant 0 : index
    %c0_2 = arith.constant 0 : index
    %1 = vector.load %arg2[%c0_1, %c0_2] : memref<128x128xbf16, #tpu.memory_space<vmem>>, vector<128x128xbf16>
    %c0_3 = arith.constant 0 : index
    %c0_4 = arith.constant 0 : index
    %2 = vector.load %arg4[%c0_3, %c0_4] : memref<128x128xbf16, #tpu.memory_space<vmem>>, vector<128x128xbf16>
    %c0_5 = arith.constant 0 : index
    %c0_6 = arith.constant 0 : index
    %3 = vector.load %arg3[%c0_5, %c0_6] : memref<128x128xbf16, #tpu.memory_space<vmem>>, vector<128x128xbf16>
    %c0_7 = arith.constant 0 : index
    %c0_8 = arith.constant 0 : index
    %4 = vector.load %arg5[%c0_7, %c0_8] : memref<1x128xf32, #tpu.memory_space<vmem>>, vector<1x128xf32>
    %c0_9 = arith.constant 0 : index
    %c0_10 = arith.constant 0 : index
    %5 = vector.load %arg6[%c0_9, %c0_10] : memref<128x128xbf16, #tpu.memory_space<vmem>>, vector<128x128xbf16>
    %c0_11 = arith.constant 0 : index
    %c0_12 = arith.constant 0 : index
    %6 = vector.load %arg7[%c0_11, %c0_12] : memref<1x128xf32, #tpu.memory_space<vmem>>, vector<1x128xf32>
    %cst = arith.constant 0.000000e+00 : f32
    %7 = vector.broadcast %cst : f32 to vector<8x96xf32>
    %cst_13 = arith.constant 0.000000e+00 : bf16
    %8 = vector.broadcast %cst_13 : bf16 to vector<8x128xbf16>
    %cst_14 = arith.constant 0.000000e+00 : bf16
    %9 = vector.broadcast %cst_14 : bf16 to vector<8x128xbf16>
    %cst_15 = arith.constant 0.000000e+00 : f32
    %10 = vector.broadcast %cst_15 : f32 to vector<8x32xf32>
    %cst_16 = arith.constant 0.000000e+00 : f32
    %11 = vector.broadcast %cst_16 : f32 to vector<8x32xf32>
    %12 = vector.extract_strided_slice %0 {offsets = [0, 0], sizes = [8, 128], strides = [1, 1]} : vector<64x128xf32> to vector<8x128xf32>
    %cst_17 = arith.constant dense<0.000000e+00> : vector<8x128xf32>
    %13 = tpu.matmul %8, %1, %cst_17 {dimension_numbers = #tpu.dot_dimension_numbers<[1], [0], [0], [1], [0, 0, 1, 1], [], []>} : vector<8x128xbf16>, vector<128x128xbf16>, vector<8x128xf32> -> vector<8x128xf32>
    %14 = arith.addf %12, %13 : vector<8x128xf32>
    %15 = vector.extract_strided_slice %14 {offsets = [0, 0], sizes = [8, 96], strides = [1, 1]} : vector<8x128xf32> to vector<8x96xf32>
    %16 = arith.negf %15 : vector<8x96xf32>
    %17 = math.exp %16 : vector<8x96xf32>
    %cst_18 = arith.constant 1.000000e+00 : f32
    %18 = vector.broadcast %cst_18 : f32 to vector<8x96xf32>
    %19 = arith.addf %18, %17 : vector<8x96xf32>
    %20 = arith.divf %18, %19 : vector<8x96xf32>
    %21 = vector.extract_strided_slice %20 {offsets = [0, 0], sizes = [8, 32], strides = [1, 1]} : vector<8x96xf32> to vector<8x32xf32>
    %22 = vector.extract_strided_slice %20 {offsets = [0, 32], sizes = [8, 32], strides = [1, 1]} : vector<8x96xf32> to vector<8x32xf32>
    %23 = vector.extract_strided_slice %20 {offsets = [0, 64], sizes = [8, 32], strides = [1, 1]} : vector<8x96xf32> to vector<8x32xf32>
    %24 = vector.extract_strided_slice %14 {offsets = [0, 96], sizes = [8, 32], strides = [1, 1]} : vector<8x128xf32> to vector<8x32xf32>
    %25 = math.tanh %24 : vector<8x32xf32>
    %26 = arith.mulf %22, %10 : vector<8x32xf32>
    %27 = arith.mulf %21, %25 : vector<8x32xf32>
    %28 = arith.addf %26, %27 : vector<8x32xf32>
    %29 = math.tanh %28 : vector<8x32xf32>
    %30 = arith.mulf %23, %29 : vector<8x32xf32>
    %31 = tpu.concatenate %30, %7 in 1 : vector<8x32xf32>, vector<8x96xf32> -> vector<8x128xf32>
    %32 = arith.truncf %31 : vector<8x128xf32> to vector<8x128xbf16>
    %cst_19 = arith.constant dense<0.000000e+00> : vector<8x128xf32>
    %33 = tpu.matmul %32, %3, %cst_19 {dimension_numbers = #tpu.dot_dimension_numbers<[1], [0], [0], [1], [0, 0, 1, 1], [], []>} : vector<8x128xbf16>, vector<128x128xbf16>, vector<8x128xf32> -> vector<8x128xf32>
    %34 = vector.broadcast %4 : vector<1x128xf32> to vector<8x128xf32>
    %35 = arith.addf %33, %34 : vector<8x128xf32>
    %cst_20 = arith.constant dense<0.000000e+00> : vector<8x128xf32>
    %36 = tpu.matmul %9, %2, %cst_20 {dimension_numbers = #tpu.dot_dimension_numbers<[1], [0], [0], [1], [0, 0, 1, 1], [], []>} : vector<8x128xbf16>, vector<128x128xbf16>, vector<8x128xf32> -> vector<8x128xf32>
    %37 = arith.addf %35, %36 : vector<8x128xf32>
    %38 = vector.extract_strided_slice %37 {offsets = [0, 0], sizes = [8, 96], strides = [1, 1]} : vector<8x128xf32> to vector<8x96xf32>
    %39 = arith.negf %38 : vector<8x96xf32>
    %40 = math.exp %39 : vector<8x96xf32>
    %cst_21 = arith.constant 1.000000e+00 : f32
    %41 = vector.broadcast %cst_21 : f32 to vector<8x96xf32>
    %42 = arith.addf %41, %40 : vector<8x96xf32>
    %43 = arith.divf %41, %42 : vector<8x96xf32>
    %44 = vector.extract_strided_slice %43 {offsets = [0, 0], sizes = [8, 32], strides = [1, 1]} : vector<8x96xf32> to vector<8x32xf32>
    %45 = vector.extract_strided_slice %43 {offsets = [0, 32], sizes = [8, 32], strides = [1, 1]} : vector<8x96xf32> to vector<8x32xf32>
    %46 = vector.extract_strided_slice %43 {offsets = [0, 64], sizes = [8, 32], strides = [1, 1]} : vector<8x96xf32> to vector<8x32xf32>
    %47 = vector.extract_strided_slice %37 {offsets = [0, 96], sizes = [8, 32], strides = [1, 1]} : vector<8x128xf32> to vector<8x32xf32>
    %48 = math.tanh %47 : vector<8x32xf32>
    %49 = arith.mulf %45, %11 : vector<8x32xf32>
    %50 = arith.mulf %44, %48 : vector<8x32xf32>
    %51 = arith.addf %49, %50 : vector<8x32xf32>
    %52 = math.tanh %51 : vector<8x32xf32>
    %53 = arith.mulf %46, %52 : vector<8x32xf32>
    %54 = tpu.concatenate %53, %7 in 1 : vector<8x32xf32>, vector<8x96xf32> -> vector<8x128xf32>
    %55 = arith.truncf %54 : vector<8x128xf32> to vector<8x128xbf16>
    %56 = vector.extract_strided_slice %0 {offsets = [8, 0], sizes = [8, 128], strides = [1, 1]} : vector<64x128xf32> to vector<8x128xf32>
    %cst_22 = arith.constant dense<0.000000e+00> : vector<8x128xf32>
    %57 = tpu.matmul %32, %1, %cst_22 {dimension_numbers = #tpu.dot_dimension_numbers<[1], [0], [0], [1], [0, 0, 1, 1], [], []>} : vector<8x128xbf16>, vector<128x128xbf16>, vector<8x128xf32> -> vector<8x128xf32>
    %58 = arith.addf %56, %57 : vector<8x128xf32>
    %59 = vector.extract_strided_slice %58 {offsets = [0, 0], sizes = [8, 96], strides = [1, 1]} : vector<8x128xf32> to vector<8x96xf32>
    %60 = arith.negf %59 : vector<8x96xf32>
    %61 = math.exp %60 : vector<8x96xf32>
    %cst_23 = arith.constant 1.000000e+00 : f32
    %62 = vector.broadcast %cst_23 : f32 to vector<8x96xf32>
    %63 = arith.addf %62, %61 : vector<8x96xf32>
    %64 = arith.divf %62, %63 : vector<8x96xf32>
    %65 = vector.extract_strided_slice %64 {offsets = [0, 0], sizes = [8, 32], strides = [1, 1]} : vector<8x96xf32> to vector<8x32xf32>
    %66 = vector.extract_strided_slice %64 {offsets = [0, 32], sizes = [8, 32], strides = [1, 1]} : vector<8x96xf32> to vector<8x32xf32>
    %67 = vector.extract_strided_slice %64 {offsets = [0, 64], sizes = [8, 32], strides = [1, 1]} : vector<8x96xf32> to vector<8x32xf32>
    %68 = vector.extract_strided_slice %58 {offsets = [0, 96], sizes = [8, 32], strides = [1, 1]} : vector<8x128xf32> to vector<8x32xf32>
    %69 = math.tanh %68 : vector<8x32xf32>
    %70 = arith.mulf %66, %28 : vector<8x32xf32>
    %71 = arith.mulf %65, %69 : vector<8x32xf32>
    %72 = arith.addf %70, %71 : vector<8x32xf32>
    %73 = math.tanh %72 : vector<8x32xf32>
    %74 = arith.mulf %67, %73 : vector<8x32xf32>
    %75 = tpu.concatenate %74, %7 in 1 : vector<8x32xf32>, vector<8x96xf32> -> vector<8x128xf32>
    %76 = arith.truncf %75 : vector<8x128xf32> to vector<8x128xbf16>
    %cst_24 = arith.constant dense<0.000000e+00> : vector<8x128xf32>
    %77 = tpu.matmul %76, %3, %cst_24 {dimension_numbers = #tpu.dot_dimension_numbers<[1], [0], [0], [1], [0, 0, 1, 1], [], []>} : vector<8x128xbf16>, vector<128x128xbf16>, vector<8x128xf32> -> vector<8x128xf32>
    %78 = vector.broadcast %4 : vector<1x128xf32> to vector<8x128xf32>
    %79 = arith.addf %77, %78 : vector<8x128xf32>
    %cst_25 = arith.constant dense<0.000000e+00> : vector<8x128xf32>
    %80 = tpu.matmul %55, %2, %cst_25 {dimension_numbers = #tpu.dot_dimension_numbers<[1], [0], [0], [1], [0, 0, 1, 1], [], []>} : vector<8x128xbf16>, vector<128x128xbf16>, vector<8x128xf32> -> vector<8x128xf32>
    %81 = arith.addf %79, %80 : vector<8x128xf32>
    %82 = vector.extract_strided_slice %81 {offsets = [0, 0], sizes = [8, 96], strides = [1, 1]} : vector<8x128xf32> to vector<8x96xf32>
    %83 = arith.negf %82 : vector<8x96xf32>
    %84 = math.exp %83 : vector<8x96xf32>
    %cst_26 = arith.constant 1.000000e+00 : f32
    %85 = vector.broadcast %cst_26 : f32 to vector<8x96xf32>
    %86 = arith.addf %85, %84 : vector<8x96xf32>
    %87 = arith.divf %85, %86 : vector<8x96xf32>
    %88 = vector.extract_strided_slice %87 {offsets = [0, 0], sizes = [8, 32], strides = [1, 1]} : vector<8x96xf32> to vector<8x32xf32>
    %89 = vector.extract_strided_slice %87 {offsets = [0, 32], sizes = [8, 32], strides = [1, 1]} : vector<8x96xf32> to vector<8x32xf32>
    %90 = vector.extract_strided_slice %87 {offsets = [0, 64], sizes = [8, 32], strides = [1, 1]} : vector<8x96xf32> to vector<8x32xf32>
    %91 = vector.extract_strided_slice %81 {offsets = [0, 96], sizes = [8, 32], strides = [1, 1]} : vector<8x128xf32> to vector<8x32xf32>
    %92 = math.tanh %91 : vector<8x32xf32>
    %93 = arith.mulf %89, %51 : vector<8x32xf32>
    %94 = arith.mulf %88, %92 : vector<8x32xf32>
    %95 = arith.addf %93, %94 : vector<8x32xf32>
    %96 = math.tanh %95 : vector<8x32xf32>
    %97 = arith.mulf %90, %96 : vector<8x32xf32>
    %98 = tpu.concatenate %97, %7 in 1 : vector<8x32xf32>, vector<8x96xf32> -> vector<8x128xf32>
    %99 = arith.truncf %98 : vector<8x128xf32> to vector<8x128xbf16>
    %100 = vector.extract_strided_slice %0 {offsets = [16, 0], sizes = [8, 128], strides = [1, 1]} : vector<64x128xf32> to vector<8x128xf32>
    %cst_27 = arith.constant dense<0.000000e+00> : vector<8x128xf32>
    %101 = tpu.matmul %76, %1, %cst_27 {dimension_numbers = #tpu.dot_dimension_numbers<[1], [0], [0], [1], [0, 0, 1, 1], [], []>} : vector<8x128xbf16>, vector<128x128xbf16>, vector<8x128xf32> -> vector<8x128xf32>
    %102 = arith.addf %100, %101 : vector<8x128xf32>
    %103 = vector.extract_strided_slice %102 {offsets = [0, 0], sizes = [8, 96], strides = [1, 1]} : vector<8x128xf32> to vector<8x96xf32>
    %104 = arith.negf %103 : vector<8x96xf32>
    %105 = math.exp %104 : vector<8x96xf32>
    %cst_28 = arith.constant 1.000000e+00 : f32
    %106 = vector.broadcast %cst_28 : f32 to vector<8x96xf32>
    %107 = arith.addf %106, %105 : vector<8x96xf32>
    %108 = arith.divf %106, %107 : vector<8x96xf32>
    %109 = vector.extract_strided_slice %108 {offsets = [0, 0], sizes = [8, 32], strides = [1, 1]} : vector<8x96xf32> to vector<8x32xf32>
    %110 = vector.extract_strided_slice %108 {offsets = [0, 32], sizes = [8, 32], strides = [1, 1]} : vector<8x96xf32> to vector<8x32xf32>
    %111 = vector.extract_strided_slice %108 {offsets = [0, 64], sizes = [8, 32], strides = [1, 1]} : vector<8x96xf32> to vector<8x32xf32>
    %112 = vector.extract_strided_slice %102 {offsets = [0, 96], sizes = [8, 32], strides = [1, 1]} : vector<8x128xf32> to vector<8x32xf32>
    %113 = math.tanh %112 : vector<8x32xf32>
    %114 = arith.mulf %110, %72 : vector<8x32xf32>
    %115 = arith.mulf %109, %113 : vector<8x32xf32>
    %116 = arith.addf %114, %115 : vector<8x32xf32>
    %117 = math.tanh %116 : vector<8x32xf32>
    %118 = arith.mulf %111, %117 : vector<8x32xf32>
    %119 = tpu.concatenate %118, %7 in 1 : vector<8x32xf32>, vector<8x96xf32> -> vector<8x128xf32>
    %120 = arith.truncf %119 : vector<8x128xf32> to vector<8x128xbf16>
    %cst_29 = arith.constant dense<0.000000e+00> : vector<8x128xf32>
    %121 = tpu.matmul %120, %3, %cst_29 {dimension_numbers = #tpu.dot_dimension_numbers<[1], [0], [0], [1], [0, 0, 1, 1], [], []>} : vector<8x128xbf16>, vector<128x128xbf16>, vector<8x128xf32> -> vector<8x128xf32>
    %122 = vector.broadcast %4 : vector<1x128xf32> to vector<8x128xf32>
    %123 = arith.addf %121, %122 : vector<8x128xf32>
    %cst_30 = arith.constant dense<0.000000e+00> : vector<8x128xf32>
    %124 = tpu.matmul %99, %2, %cst_30 {dimension_numbers = #tpu.dot_dimension_numbers<[1], [0], [0], [1], [0, 0, 1, 1], [], []>} : vector<8x128xbf16>, vector<128x128xbf16>, vector<8x128xf32> -> vector<8x128xf32>
    %125 = arith.addf %123, %124 : vector<8x128xf32>
    %126 = vector.extract_strided_slice %125 {offsets = [0, 0], sizes = [8, 96], strides = [1, 1]} : vector<8x128xf32> to vector<8x96xf32>
    %127 = arith.negf %126 : vector<8x96xf32>
    %128 = math.exp %127 : vector<8x96xf32>
    %cst_31 = arith.constant 1.000000e+00 : f32
    %129 = vector.broadcast %cst_31 : f32 to vector<8x96xf32>
    %130 = arith.addf %129, %128 : vector<8x96xf32>
    %131 = arith.divf %129, %130 : vector<8x96xf32>
    %132 = vector.extract_strided_slice %131 {offsets = [0, 0], sizes = [8, 32], strides = [1, 1]} : vector<8x96xf32> to vector<8x32xf32>
    %133 = vector.extract_strided_slice %131 {offsets = [0, 32], sizes = [8, 32], strides = [1, 1]} : vector<8x96xf32> to vector<8x32xf32>
    %134 = vector.extract_strided_slice %131 {offsets = [0, 64], sizes = [8, 32], strides = [1, 1]} : vector<8x96xf32> to vector<8x32xf32>
    %135 = vector.extract_strided_slice %125 {offsets = [0, 96], sizes = [8, 32], strides = [1, 1]} : vector<8x128xf32> to vector<8x32xf32>
    %136 = math.tanh %135 : vector<8x32xf32>
    %137 = arith.mulf %133, %95 : vector<8x32xf32>
    %138 = arith.mulf %132, %136 : vector<8x32xf32>
    %139 = arith.addf %137, %138 : vector<8x32xf32>
    %140 = math.tanh %139 : vector<8x32xf32>
    %141 = arith.mulf %134, %140 : vector<8x32xf32>
    %142 = tpu.concatenate %141, %7 in 1 : vector<8x32xf32>, vector<8x96xf32> -> vector<8x128xf32>
    %143 = arith.truncf %142 : vector<8x128xf32> to vector<8x128xbf16>
    %144 = vector.extract_strided_slice %0 {offsets = [24, 0], sizes = [8, 128], strides = [1, 1]} : vector<64x128xf32> to vector<8x128xf32>
    %cst_32 = arith.constant dense<0.000000e+00> : vector<8x128xf32>
    %145 = tpu.matmul %120, %1, %cst_32 {dimension_numbers = #tpu.dot_dimension_numbers<[1], [0], [0], [1], [0, 0, 1, 1], [], []>} : vector<8x128xbf16>, vector<128x128xbf16>, vector<8x128xf32> -> vector<8x128xf32>
    %146 = arith.addf %144, %145 : vector<8x128xf32>
    %147 = vector.extract_strided_slice %146 {offsets = [0, 0], sizes = [8, 96], strides = [1, 1]} : vector<8x128xf32> to vector<8x96xf32>
    %148 = arith.negf %147 : vector<8x96xf32>
    %149 = math.exp %148 : vector<8x96xf32>
    %cst_33 = arith.constant 1.000000e+00 : f32
    %150 = vector.broadcast %cst_33 : f32 to vector<8x96xf32>
    %151 = arith.addf %150, %149 : vector<8x96xf32>
    %152 = arith.divf %150, %151 : vector<8x96xf32>
    %153 = vector.extract_strided_slice %152 {offsets = [0, 0], sizes = [8, 32], strides = [1, 1]} : vector<8x96xf32> to vector<8x32xf32>
    %154 = vector.extract_strided_slice %152 {offsets = [0, 32], sizes = [8, 32], strides = [1, 1]} : vector<8x96xf32> to vector<8x32xf32>
    %155 = vector.extract_strided_slice %152 {offsets = [0, 64], sizes = [8, 32], strides = [1, 1]} : vector<8x96xf32> to vector<8x32xf32>
    %156 = vector.extract_strided_slice %146 {offsets = [0, 96], sizes = [8, 32], strides = [1, 1]} : vector<8x128xf32> to vector<8x32xf32>
    %157 = math.tanh %156 : vector<8x32xf32>
    %158 = arith.mulf %154, %116 : vector<8x32xf32>
    %159 = arith.mulf %153, %157 : vector<8x32xf32>
    %160 = arith.addf %158, %159 : vector<8x32xf32>
    %161 = math.tanh %160 : vector<8x32xf32>
    %162 = arith.mulf %155, %161 : vector<8x32xf32>
    %163 = tpu.concatenate %162, %7 in 1 : vector<8x32xf32>, vector<8x96xf32> -> vector<8x128xf32>
    %164 = arith.truncf %163 : vector<8x128xf32> to vector<8x128xbf16>
    %cst_34 = arith.constant dense<0.000000e+00> : vector<8x128xf32>
    %165 = tpu.matmul %164, %3, %cst_34 {dimension_numbers = #tpu.dot_dimension_numbers<[1], [0], [0], [1], [0, 0, 1, 1], [], []>} : vector<8x128xbf16>, vector<128x128xbf16>, vector<8x128xf32> -> vector<8x128xf32>
    %166 = vector.broadcast %4 : vector<1x128xf32> to vector<8x128xf32>
    %167 = arith.addf %165, %166 : vector<8x128xf32>
    %cst_35 = arith.constant dense<0.000000e+00> : vector<8x128xf32>
    %168 = tpu.matmul %143, %2, %cst_35 {dimension_numbers = #tpu.dot_dimension_numbers<[1], [0], [0], [1], [0, 0, 1, 1], [], []>} : vector<8x128xbf16>, vector<128x128xbf16>, vector<8x128xf32> -> vector<8x128xf32>
    %169 = arith.addf %167, %168 : vector<8x128xf32>
    %170 = vector.extract_strided_slice %169 {offsets = [0, 0], sizes = [8, 96], strides = [1, 1]} : vector<8x128xf32> to vector<8x96xf32>
    %171 = arith.negf %170 : vector<8x96xf32>
    %172 = math.exp %171 : vector<8x96xf32>
    %cst_36 = arith.constant 1.000000e+00 : f32
    %173 = vector.broadcast %cst_36 : f32 to vector<8x96xf32>
    %174 = arith.addf %173, %172 : vector<8x96xf32>
    %175 = arith.divf %173, %174 : vector<8x96xf32>
    %176 = vector.extract_strided_slice %175 {offsets = [0, 0], sizes = [8, 32], strides = [1, 1]} : vector<8x96xf32> to vector<8x32xf32>
    %177 = vector.extract_strided_slice %175 {offsets = [0, 32], sizes = [8, 32], strides = [1, 1]} : vector<8x96xf32> to vector<8x32xf32>
    %178 = vector.extract_strided_slice %175 {offsets = [0, 64], sizes = [8, 32], strides = [1, 1]} : vector<8x96xf32> to vector<8x32xf32>
    %179 = vector.extract_strided_slice %169 {offsets = [0, 96], sizes = [8, 32], strides = [1, 1]} : vector<8x128xf32> to vector<8x32xf32>
    %180 = math.tanh %179 : vector<8x32xf32>
    %181 = arith.mulf %177, %139 : vector<8x32xf32>
    %182 = arith.mulf %176, %180 : vector<8x32xf32>
    %183 = arith.addf %181, %182 : vector<8x32xf32>
    %184 = math.tanh %183 : vector<8x32xf32>
    %185 = arith.mulf %178, %184 : vector<8x32xf32>
    %186 = tpu.concatenate %185, %7 in 1 : vector<8x32xf32>, vector<8x96xf32> -> vector<8x128xf32>
    %187 = arith.truncf %186 : vector<8x128xf32> to vector<8x128xbf16>
    %188 = vector.extract_strided_slice %0 {offsets = [32, 0], sizes = [8, 128], strides = [1, 1]} : vector<64x128xf32> to vector<8x128xf32>
    %cst_37 = arith.constant dense<0.000000e+00> : vector<8x128xf32>
    %189 = tpu.matmul %164, %1, %cst_37 {dimension_numbers = #tpu.dot_dimension_numbers<[1], [0], [0], [1], [0, 0, 1, 1], [], []>} : vector<8x128xbf16>, vector<128x128xbf16>, vector<8x128xf32> -> vector<8x128xf32>
    %190 = arith.addf %188, %189 : vector<8x128xf32>
    %191 = vector.extract_strided_slice %190 {offsets = [0, 0], sizes = [8, 96], strides = [1, 1]} : vector<8x128xf32> to vector<8x96xf32>
    %192 = arith.negf %191 : vector<8x96xf32>
    %193 = math.exp %192 : vector<8x96xf32>
    %cst_38 = arith.constant 1.000000e+00 : f32
    %194 = vector.broadcast %cst_38 : f32 to vector<8x96xf32>
    %195 = arith.addf %194, %193 : vector<8x96xf32>
    %196 = arith.divf %194, %195 : vector<8x96xf32>
    %197 = vector.extract_strided_slice %196 {offsets = [0, 0], sizes = [8, 32], strides = [1, 1]} : vector<8x96xf32> to vector<8x32xf32>
    %198 = vector.extract_strided_slice %196 {offsets = [0, 32], sizes = [8, 32], strides = [1, 1]} : vector<8x96xf32> to vector<8x32xf32>
    %199 = vector.extract_strided_slice %196 {offsets = [0, 64], sizes = [8, 32], strides = [1, 1]} : vector<8x96xf32> to vector<8x32xf32>
    %200 = vector.extract_strided_slice %190 {offsets = [0, 96], sizes = [8, 32], strides = [1, 1]} : vector<8x128xf32> to vector<8x32xf32>
    %201 = math.tanh %200 : vector<8x32xf32>
    %202 = arith.mulf %198, %160 : vector<8x32xf32>
    %203 = arith.mulf %197, %201 : vector<8x32xf32>
    %204 = arith.addf %202, %203 : vector<8x32xf32>
    %205 = math.tanh %204 : vector<8x32xf32>
    %206 = arith.mulf %199, %205 : vector<8x32xf32>
    %207 = tpu.concatenate %206, %7 in 1 : vector<8x32xf32>, vector<8x96xf32> -> vector<8x128xf32>
    %208 = arith.truncf %207 : vector<8x128xf32> to vector<8x128xbf16>
    %cst_39 = arith.constant dense<0.000000e+00> : vector<8x128xf32>
    %209 = tpu.matmul %208, %3, %cst_39 {dimension_numbers = #tpu.dot_dimension_numbers<[1], [0], [0], [1], [0, 0, 1, 1], [], []>} : vector<8x128xbf16>, vector<128x128xbf16>, vector<8x128xf32> -> vector<8x128xf32>
    %210 = vector.broadcast %4 : vector<1x128xf32> to vector<8x128xf32>
    %211 = arith.addf %209, %210 : vector<8x128xf32>
    %cst_40 = arith.constant dense<0.000000e+00> : vector<8x128xf32>
    %212 = tpu.matmul %187, %2, %cst_40 {dimension_numbers = #tpu.dot_dimension_numbers<[1], [0], [0], [1], [0, 0, 1, 1], [], []>} : vector<8x128xbf16>, vector<128x128xbf16>, vector<8x128xf32> -> vector<8x128xf32>
    %213 = arith.addf %211, %212 : vector<8x128xf32>
    %214 = vector.extract_strided_slice %213 {offsets = [0, 0], sizes = [8, 96], strides = [1, 1]} : vector<8x128xf32> to vector<8x96xf32>
    %215 = arith.negf %214 : vector<8x96xf32>
    %216 = math.exp %215 : vector<8x96xf32>
    %cst_41 = arith.constant 1.000000e+00 : f32
    %217 = vector.broadcast %cst_41 : f32 to vector<8x96xf32>
    %218 = arith.addf %217, %216 : vector<8x96xf32>
    %219 = arith.divf %217, %218 : vector<8x96xf32>
    %220 = vector.extract_strided_slice %219 {offsets = [0, 0], sizes = [8, 32], strides = [1, 1]} : vector<8x96xf32> to vector<8x32xf32>
    %221 = vector.extract_strided_slice %219 {offsets = [0, 32], sizes = [8, 32], strides = [1, 1]} : vector<8x96xf32> to vector<8x32xf32>
    %222 = vector.extract_strided_slice %219 {offsets = [0, 64], sizes = [8, 32], strides = [1, 1]} : vector<8x96xf32> to vector<8x32xf32>
    %223 = vector.extract_strided_slice %213 {offsets = [0, 96], sizes = [8, 32], strides = [1, 1]} : vector<8x128xf32> to vector<8x32xf32>
    %224 = math.tanh %223 : vector<8x32xf32>
    %225 = arith.mulf %221, %183 : vector<8x32xf32>
    %226 = arith.mulf %220, %224 : vector<8x32xf32>
    %227 = arith.addf %225, %226 : vector<8x32xf32>
    %228 = math.tanh %227 : vector<8x32xf32>
    %229 = arith.mulf %222, %228 : vector<8x32xf32>
    %230 = tpu.concatenate %229, %7 in 1 : vector<8x32xf32>, vector<8x96xf32> -> vector<8x128xf32>
    %231 = arith.truncf %230 : vector<8x128xf32> to vector<8x128xbf16>
    %232 = vector.extract_strided_slice %0 {offsets = [40, 0], sizes = [8, 128], strides = [1, 1]} : vector<64x128xf32> to vector<8x128xf32>
    %cst_42 = arith.constant dense<0.000000e+00> : vector<8x128xf32>
    %233 = tpu.matmul %208, %1, %cst_42 {dimension_numbers = #tpu.dot_dimension_numbers<[1], [0], [0], [1], [0, 0, 1, 1], [], []>} : vector<8x128xbf16>, vector<128x128xbf16>, vector<8x128xf32> -> vector<8x128xf32>
    %234 = arith.addf %232, %233 : vector<8x128xf32>
    %235 = vector.extract_strided_slice %234 {offsets = [0, 0], sizes = [8, 96], strides = [1, 1]} : vector<8x128xf32> to vector<8x96xf32>
    %236 = arith.negf %235 : vector<8x96xf32>
    %237 = math.exp %236 : vector<8x96xf32>
    %cst_43 = arith.constant 1.000000e+00 : f32
    %238 = vector.broadcast %cst_43 : f32 to vector<8x96xf32>
    %239 = arith.addf %238, %237 : vector<8x96xf32>
    %240 = arith.divf %238, %239 : vector<8x96xf32>
    %241 = vector.extract_strided_slice %240 {offsets = [0, 0], sizes = [8, 32], strides = [1, 1]} : vector<8x96xf32> to vector<8x32xf32>
    %242 = vector.extract_strided_slice %240 {offsets = [0, 32], sizes = [8, 32], strides = [1, 1]} : vector<8x96xf32> to vector<8x32xf32>
    %243 = vector.extract_strided_slice %240 {offsets = [0, 64], sizes = [8, 32], strides = [1, 1]} : vector<8x96xf32> to vector<8x32xf32>
    %244 = vector.extract_strided_slice %234 {offsets = [0, 96], sizes = [8, 32], strides = [1, 1]} : vector<8x128xf32> to vector<8x32xf32>
    %245 = math.tanh %244 : vector<8x32xf32>
    %246 = arith.mulf %242, %204 : vector<8x32xf32>
    %247 = arith.mulf %241, %245 : vector<8x32xf32>
    %248 = arith.addf %246, %247 : vector<8x32xf32>
    %249 = math.tanh %248 : vector<8x32xf32>
    %250 = arith.mulf %243, %249 : vector<8x32xf32>
    %251 = tpu.concatenate %250, %7 in 1 : vector<8x32xf32>, vector<8x96xf32> -> vector<8x128xf32>
    %252 = arith.truncf %251 : vector<8x128xf32> to vector<8x128xbf16>
    %cst_44 = arith.constant dense<0.000000e+00> : vector<8x128xf32>
    %253 = tpu.matmul %252, %3, %cst_44 {dimension_numbers = #tpu.dot_dimension_numbers<[1], [0], [0], [1], [0, 0, 1, 1], [], []>} : vector<8x128xbf16>, vector<128x128xbf16>, vector<8x128xf32> -> vector<8x128xf32>
    %254 = vector.broadcast %4 : vector<1x128xf32> to vector<8x128xf32>
    %255 = arith.addf %253, %254 : vector<8x128xf32>
    %cst_45 = arith.constant dense<0.000000e+00> : vector<8x128xf32>
    %256 = tpu.matmul %231, %2, %cst_45 {dimension_numbers = #tpu.dot_dimension_numbers<[1], [0], [0], [1], [0, 0, 1, 1], [], []>} : vector<8x128xbf16>, vector<128x128xbf16>, vector<8x128xf32> -> vector<8x128xf32>
    %257 = arith.addf %255, %256 : vector<8x128xf32>
    %258 = vector.extract_strided_slice %257 {offsets = [0, 0], sizes = [8, 96], strides = [1, 1]} : vector<8x128xf32> to vector<8x96xf32>
    %259 = arith.negf %258 : vector<8x96xf32>
    %260 = math.exp %259 : vector<8x96xf32>
    %cst_46 = arith.constant 1.000000e+00 : f32
    %261 = vector.broadcast %cst_46 : f32 to vector<8x96xf32>
    %262 = arith.addf %261, %260 : vector<8x96xf32>
    %263 = arith.divf %261, %262 : vector<8x96xf32>
    %264 = vector.extract_strided_slice %263 {offsets = [0, 0], sizes = [8, 32], strides = [1, 1]} : vector<8x96xf32> to vector<8x32xf32>
    %265 = vector.extract_strided_slice %263 {offsets = [0, 32], sizes = [8, 32], strides = [1, 1]} : vector<8x96xf32> to vector<8x32xf32>
    %266 = vector.extract_strided_slice %263 {offsets = [0, 64], sizes = [8, 32], strides = [1, 1]} : vector<8x96xf32> to vector<8x32xf32>
    %267 = vector.extract_strided_slice %257 {offsets = [0, 96], sizes = [8, 32], strides = [1, 1]} : vector<8x128xf32> to vector<8x32xf32>
    %268 = math.tanh %267 : vector<8x32xf32>
    %269 = arith.mulf %265, %227 : vector<8x32xf32>
    %270 = arith.mulf %264, %268 : vector<8x32xf32>
    %271 = arith.addf %269, %270 : vector<8x32xf32>
    %272 = math.tanh %271 : vector<8x32xf32>
    %273 = arith.mulf %266, %272 : vector<8x32xf32>
    %274 = tpu.concatenate %273, %7 in 1 : vector<8x32xf32>, vector<8x96xf32> -> vector<8x128xf32>
    %275 = arith.truncf %274 : vector<8x128xf32> to vector<8x128xbf16>
    %276 = vector.extract_strided_slice %0 {offsets = [48, 0], sizes = [8, 128], strides = [1, 1]} : vector<64x128xf32> to vector<8x128xf32>
    %cst_47 = arith.constant dense<0.000000e+00> : vector<8x128xf32>
    %277 = tpu.matmul %252, %1, %cst_47 {dimension_numbers = #tpu.dot_dimension_numbers<[1], [0], [0], [1], [0, 0, 1, 1], [], []>} : vector<8x128xbf16>, vector<128x128xbf16>, vector<8x128xf32> -> vector<8x128xf32>
    %278 = arith.addf %276, %277 : vector<8x128xf32>
    %279 = vector.extract_strided_slice %278 {offsets = [0, 0], sizes = [8, 96], strides = [1, 1]} : vector<8x128xf32> to vector<8x96xf32>
    %280 = arith.negf %279 : vector<8x96xf32>
    %281 = math.exp %280 : vector<8x96xf32>
    %cst_48 = arith.constant 1.000000e+00 : f32
    %282 = vector.broadcast %cst_48 : f32 to vector<8x96xf32>
    %283 = arith.addf %282, %281 : vector<8x96xf32>
    %284 = arith.divf %282, %283 : vector<8x96xf32>
    %285 = vector.extract_strided_slice %284 {offsets = [0, 0], sizes = [8, 32], strides = [1, 1]} : vector<8x96xf32> to vector<8x32xf32>
    %286 = vector.extract_strided_slice %284 {offsets = [0, 32], sizes = [8, 32], strides = [1, 1]} : vector<8x96xf32> to vector<8x32xf32>
    %287 = vector.extract_strided_slice %284 {offsets = [0, 64], sizes = [8, 32], strides = [1, 1]} : vector<8x96xf32> to vector<8x32xf32>
    %288 = vector.extract_strided_slice %278 {offsets = [0, 96], sizes = [8, 32], strides = [1, 1]} : vector<8x128xf32> to vector<8x32xf32>
    %289 = math.tanh %288 : vector<8x32xf32>
    %290 = arith.mulf %286, %248 : vector<8x32xf32>
    %291 = arith.mulf %285, %289 : vector<8x32xf32>
    %292 = arith.addf %290, %291 : vector<8x32xf32>
    %293 = math.tanh %292 : vector<8x32xf32>
    %294 = arith.mulf %287, %293 : vector<8x32xf32>
    %295 = tpu.concatenate %294, %7 in 1 : vector<8x32xf32>, vector<8x96xf32> -> vector<8x128xf32>
    %296 = arith.truncf %295 : vector<8x128xf32> to vector<8x128xbf16>
    %cst_49 = arith.constant dense<0.000000e+00> : vector<8x128xf32>
    %297 = tpu.matmul %296, %3, %cst_49 {dimension_numbers = #tpu.dot_dimension_numbers<[1], [0], [0], [1], [0, 0, 1, 1], [], []>} : vector<8x128xbf16>, vector<128x128xbf16>, vector<8x128xf32> -> vector<8x128xf32>
    %298 = vector.broadcast %4 : vector<1x128xf32> to vector<8x128xf32>
    %299 = arith.addf %297, %298 : vector<8x128xf32>
    %cst_50 = arith.constant dense<0.000000e+00> : vector<8x128xf32>
    %300 = tpu.matmul %275, %2, %cst_50 {dimension_numbers = #tpu.dot_dimension_numbers<[1], [0], [0], [1], [0, 0, 1, 1], [], []>} : vector<8x128xbf16>, vector<128x128xbf16>, vector<8x128xf32> -> vector<8x128xf32>
    %301 = arith.addf %299, %300 : vector<8x128xf32>
    %302 = vector.extract_strided_slice %301 {offsets = [0, 0], sizes = [8, 96], strides = [1, 1]} : vector<8x128xf32> to vector<8x96xf32>
    %303 = arith.negf %302 : vector<8x96xf32>
    %304 = math.exp %303 : vector<8x96xf32>
    %cst_51 = arith.constant 1.000000e+00 : f32
    %305 = vector.broadcast %cst_51 : f32 to vector<8x96xf32>
    %306 = arith.addf %305, %304 : vector<8x96xf32>
    %307 = arith.divf %305, %306 : vector<8x96xf32>
    %308 = vector.extract_strided_slice %307 {offsets = [0, 0], sizes = [8, 32], strides = [1, 1]} : vector<8x96xf32> to vector<8x32xf32>
    %309 = vector.extract_strided_slice %307 {offsets = [0, 32], sizes = [8, 32], strides = [1, 1]} : vector<8x96xf32> to vector<8x32xf32>
    %310 = vector.extract_strided_slice %307 {offsets = [0, 64], sizes = [8, 32], strides = [1, 1]} : vector<8x96xf32> to vector<8x32xf32>
    %311 = vector.extract_strided_slice %301 {offsets = [0, 96], sizes = [8, 32], strides = [1, 1]} : vector<8x128xf32> to vector<8x32xf32>
    %312 = math.tanh %311 : vector<8x32xf32>
    %313 = arith.mulf %309, %271 : vector<8x32xf32>
    %314 = arith.mulf %308, %312 : vector<8x32xf32>
    %315 = arith.addf %313, %314 : vector<8x32xf32>
    %316 = math.tanh %315 : vector<8x32xf32>
    %317 = arith.mulf %310, %316 : vector<8x32xf32>
    %318 = tpu.concatenate %317, %7 in 1 : vector<8x32xf32>, vector<8x96xf32> -> vector<8x128xf32>
    %319 = arith.truncf %318 : vector<8x128xf32> to vector<8x128xbf16>
    %320 = vector.extract_strided_slice %0 {offsets = [56, 0], sizes = [8, 128], strides = [1, 1]} : vector<64x128xf32> to vector<8x128xf32>
    %cst_52 = arith.constant dense<0.000000e+00> : vector<8x128xf32>
    %321 = tpu.matmul %296, %1, %cst_52 {dimension_numbers = #tpu.dot_dimension_numbers<[1], [0], [0], [1], [0, 0, 1, 1], [], []>} : vector<8x128xbf16>, vector<128x128xbf16>, vector<8x128xf32> -> vector<8x128xf32>
    %322 = arith.addf %320, %321 : vector<8x128xf32>
    %323 = vector.extract_strided_slice %322 {offsets = [0, 0], sizes = [8, 96], strides = [1, 1]} : vector<8x128xf32> to vector<8x96xf32>
    %324 = arith.negf %323 : vector<8x96xf32>
    %325 = math.exp %324 : vector<8x96xf32>
    %cst_53 = arith.constant 1.000000e+00 : f32
    %326 = vector.broadcast %cst_53 : f32 to vector<8x96xf32>
    %327 = arith.addf %326, %325 : vector<8x96xf32>
    %328 = arith.divf %326, %327 : vector<8x96xf32>
    %329 = vector.extract_strided_slice %328 {offsets = [0, 0], sizes = [8, 32], strides = [1, 1]} : vector<8x96xf32> to vector<8x32xf32>
    %330 = vector.extract_strided_slice %328 {offsets = [0, 32], sizes = [8, 32], strides = [1, 1]} : vector<8x96xf32> to vector<8x32xf32>
    %331 = vector.extract_strided_slice %328 {offsets = [0, 64], sizes = [8, 32], strides = [1, 1]} : vector<8x96xf32> to vector<8x32xf32>
    %332 = vector.extract_strided_slice %322 {offsets = [0, 96], sizes = [8, 32], strides = [1, 1]} : vector<8x128xf32> to vector<8x32xf32>
    %333 = math.tanh %332 : vector<8x32xf32>
    %334 = arith.mulf %330, %292 : vector<8x32xf32>
    %335 = arith.mulf %329, %333 : vector<8x32xf32>
    %336 = arith.addf %334, %335 : vector<8x32xf32>
    %337 = math.tanh %336 : vector<8x32xf32>
    %338 = arith.mulf %331, %337 : vector<8x32xf32>
    %339 = tpu.concatenate %338, %7 in 1 : vector<8x32xf32>, vector<8x96xf32> -> vector<8x128xf32>
    %340 = arith.truncf %339 : vector<8x128xf32> to vector<8x128xbf16>
    %cst_54 = arith.constant dense<0.000000e+00> : vector<8x128xf32>
    %341 = tpu.matmul %340, %3, %cst_54 {dimension_numbers = #tpu.dot_dimension_numbers<[1], [0], [0], [1], [0, 0, 1, 1], [], []>} : vector<8x128xbf16>, vector<128x128xbf16>, vector<8x128xf32> -> vector<8x128xf32>
    %342 = vector.broadcast %4 : vector<1x128xf32> to vector<8x128xf32>
    %343 = arith.addf %341, %342 : vector<8x128xf32>
    %cst_55 = arith.constant dense<0.000000e+00> : vector<8x128xf32>
    %344 = tpu.matmul %319, %2, %cst_55 {dimension_numbers = #tpu.dot_dimension_numbers<[1], [0], [0], [1], [0, 0, 1, 1], [], []>} : vector<8x128xbf16>, vector<128x128xbf16>, vector<8x128xf32> -> vector<8x128xf32>
    %345 = arith.addf %343, %344 : vector<8x128xf32>
    %346 = vector.extract_strided_slice %345 {offsets = [0, 0], sizes = [8, 96], strides = [1, 1]} : vector<8x128xf32> to vector<8x96xf32>
    %347 = arith.negf %346 : vector<8x96xf32>
    %348 = math.exp %347 : vector<8x96xf32>
    %cst_56 = arith.constant 1.000000e+00 : f32
    %349 = vector.broadcast %cst_56 : f32 to vector<8x96xf32>
    %350 = arith.addf %349, %348 : vector<8x96xf32>
    %351 = arith.divf %349, %350 : vector<8x96xf32>
    %352 = vector.extract_strided_slice %351 {offsets = [0, 0], sizes = [8, 32], strides = [1, 1]} : vector<8x96xf32> to vector<8x32xf32>
    %353 = vector.extract_strided_slice %351 {offsets = [0, 32], sizes = [8, 32], strides = [1, 1]} : vector<8x96xf32> to vector<8x32xf32>
    %354 = vector.extract_strided_slice %351 {offsets = [0, 64], sizes = [8, 32], strides = [1, 1]} : vector<8x96xf32> to vector<8x32xf32>
    %355 = vector.extract_strided_slice %345 {offsets = [0, 96], sizes = [8, 32], strides = [1, 1]} : vector<8x128xf32> to vector<8x32xf32>
    %356 = math.tanh %355 : vector<8x32xf32>
    %357 = arith.mulf %353, %315 : vector<8x32xf32>
    %358 = arith.mulf %352, %356 : vector<8x32xf32>
    %359 = arith.addf %357, %358 : vector<8x32xf32>
    %360 = math.tanh %359 : vector<8x32xf32>
    %361 = arith.mulf %354, %360 : vector<8x32xf32>
    %362 = tpu.concatenate %361, %7 in 1 : vector<8x32xf32>, vector<8x96xf32> -> vector<8x128xf32>
    %363 = tpu.concatenate %54, %98, %142, %186, %230, %274, %318, %362 in 0 : vector<8x128xf32>, vector<8x128xf32>, vector<8x128xf32>, vector<8x128xf32>, vector<8x128xf32>, vector<8x128xf32>, vector<8x128xf32>, vector<8x128xf32> -> vector<64x128xf32>
    %364 = arith.truncf %363 : vector<64x128xf32> to vector<64x128xbf16>
    %cst_57 = arith.constant dense<0.000000e+00> : vector<64x128xf32>
    %365 = tpu.matmul %364, %5, %cst_57 {dimension_numbers = #tpu.dot_dimension_numbers<[1], [0], [0], [1], [0, 0, 1, 1], [], []>} : vector<64x128xbf16>, vector<128x128xbf16>, vector<64x128xf32> -> vector<64x128xf32>
    %366 = vector.broadcast %6 : vector<1x128xf32> to vector<64x128xf32>
    %367 = arith.addf %365, %366 : vector<64x128xf32>
    %cst_58 = arith.constant dense<0xFF800000> : vector<64xf32>
    %368 = vector.multi_reduction <maximumf>, %367, %cst_58 [1] : vector<64x128xf32> to vector<64xf32>
    %369 = vector.shape_cast %368 : vector<64xf32> to vector<64x1xf32>
    %370 = vector.broadcast %369 : vector<64x1xf32> to vector<64x128xf32>
    %371 = arith.subf %367, %370 : vector<64x128xf32>
    %372 = math.exp %371 : vector<64x128xf32>
    %cst_59 = arith.constant dense<0.000000e+00> : vector<64xf32>
    %373 = vector.multi_reduction <add>, %372, %cst_59 [1] : vector<64x128xf32> to vector<64xf32>
    %374 = vector.shape_cast %373 : vector<64xf32> to vector<64x1xf32>
    %375 = math.log %374 : vector<64x1xf32>
    %376 = vector.broadcast %375 : vector<64x1xf32> to vector<64x128xf32>
    %377 = arith.subf %371, %376 : vector<64x128xf32>
    %c0_60 = arith.constant 0 : index
    %c0_61 = arith.constant 0 : index
    %378 = vector.load %arg8[%c0_60, %c0_61] : memref<64x128xf32, #tpu.memory_space<vmem>>, vector<64x128xf32>
    tpu.vector_store %arg8[%c0_60, %c0_61], %377 {strides = array<i32>} : memref<64x128xf32, #tpu.memory_space<vmem>>, vector<64x128xf32>,
    return
  }
  func.func @transform_0(%arg0: i32) -> (i32, i32) {
    %c0_i32 = arith.constant 0 : i32
    %c0_i32_0 = arith.constant 0 : i32
    %c0_i32_1 = arith.constant 0 : i32
    return %c0_i32, %c0_i32_0 : i32, i32
  }
  func.func @transform_1(%arg0: i32) -> (i32, i32) {
    %c0_i32 = arith.constant 0 : i32
    %c0_i32_0 = arith.constant 0 : i32
    %c0_i32_1 = arith.constant 0 : i32
    return %c0_i32, %c0_i32_0 : i32, i32
  }
  func.func @transform_2(%arg0: i32) -> (i32, i32) {
    %c0_i32 = arith.constant 0 : i32
    %c0_i32_0 = arith.constant 0 : i32
    %c0_i32_1 = arith.constant 0 : i32
    return %c0_i32, %c0_i32_0 : i32, i32
  }
  func.func @transform_3(%arg0: i32) -> (i32, i32) {
    %c0_i32 = arith.constant 0 : i32
    %c0_i32_0 = arith.constant 0 : i32
    %c0_i32_1 = arith.constant 0 : i32
    return %c0_i32, %c0_i32_0 : i32, i32
  }
  func.func @transform_4(%arg0: i32) -> (i32, i32) {
    %c0_i32 = arith.constant 0 : i32
    %c0_i32_0 = arith.constant 0 : i32
    %c0_i32_1 = arith.constant 0 : i32
    return %c0_i32, %c0_i32_0 : i32, i32
  }
  func.func @transform_5(%arg0: i32) -> (i32, i32) {
    %c0_i32 = arith.constant 0 : i32
    %c0_i32_0 = arith.constant 0 : i32
    %c0_i32_1 = arith.constant 0 : i32
    return %c0_i32, %c0_i32_0 : i32, i32
  }
  func.func @transform_6(%arg0: i32) -> (i32, i32) {
    %c0_i32 = arith.constant 0 : i32
    %c0_i32_0 = arith.constant 0 : i32
    %c0_i32_1 = arith.constant 0 : i32
    return %c0_i32, %c0_i32_0 : i32, i32
  }
  func.func @transform_7(%arg0: i32) -> (i32, i32) {
    %c0_i32 = arith.constant 0 : i32
    %c0_i32_0 = arith.constant 0 : i32
    %c0_i32_1 = arith.constant 0 : i32
    return %c0_i32, %c0_i32_0 : i32, i32
  }
}

</mosaic_0001>

<llo_original>
// kernel: lstm_classifier_forward.1
$region0: #{lstm_classifier_forward.1}
  #allocation0 [shape = 'u32[]', space=smem, size = 0x4, offset = 0x4, fixed_abs, tag = 'smem constant byte address 0x4 - core index']
  #allocation1 [shape = 'u32[144,128]{1,0:T(1,128)}', space=vmem, size = 0x12000, scoped, tag = 'internal scratch']
  %s0 = inlined_call_operand.vmem [shape: f32[64,128], index: 0, kind: input, shape index: {}]
  %s1 = inlined_call_operand.vmem [shape: bf16[128,128], index: 1, kind: input, shape index: {}]
  %s2 = inlined_call_operand.vmem [shape: bf16[128,128], index: 2, kind: input, shape index: {}]
  %s3 = inlined_call_operand.vmem [shape: bf16[128,128], index: 3, kind: input, shape index: {}]
  %s4 = inlined_call_operand.vmem [shape: f32[1,128], index: 4, kind: input, shape index: {}]
  %s5 = inlined_call_operand.vmem [shape: bf16[128,128], index: 5, kind: input, shape index: {}]
  %s6 = inlined_call_operand.vmem [shape: f32[1,128], index: 6, kind: input, shape index: {}]
  %s7 = inlined_call_operand.vmem [shape: f32[64,128], index: 7, kind: output, shape index: {}]
  %s8 = sld [smem:[#allocation0]]
  $region38: #{lstm_classifier_forward.1} parent=0
    _
  %s10 = ssub.s32 1, %s8
  %s11 = scalar_select 0, %s10, %s8
  // Predicated region
  $region2: #{lstm_classifier_forward.1} parent=0 // pred_check
    _
  $region3: #{lstm_classifier_forward.1} parent=0 // pred_check_branch
    %13 = sbr.rel (0) target = $region5
  $region4: #{lstm_classifier_forward.1} parent=0 // pred_region
    _
  $region5: #{lstm_classifier_forward.1} parent=0 // pred_fallthru
    _
  // Predicated region
  $region6: #{lstm_classifier_forward.1} parent=0 // pred_check
    _
  $region7: #{lstm_classifier_forward.1} parent=0 // pred_check_branch
    %15 = sbr.rel (0) target = $region9
  $region8: #{lstm_classifier_forward.1} parent=0 // pred_region
    _
  $region9: #{lstm_classifier_forward.1} parent=0 // pred_fallthru
    _
  // Predicated region
  $region10: #{lstm_classifier_forward.1} parent=0 // pred_check
    _
  $region11: #{lstm_classifier_forward.1} parent=0 // pred_check_branch
    %17 = sbr.rel (0) target = $region13
  $region12: #{lstm_classifier_forward.1} parent=0 // pred_region
    _
  $region13: #{lstm_classifier_forward.1} parent=0 // pred_fallthru
    _
  // Predicated region
  $region14: #{lstm_classifier_forward.1} parent=0 // pred_check
    _
  $region15: #{lstm_classifier_forward.1} parent=0 // pred_check_branch
    %19 = sbr.rel (0) target = $region17
  $region16: #{lstm_classifier_forward.1} parent=0 // pred_region
    _
  $region17: #{lstm_classifier_forward.1} parent=0 // pred_fallthru
    _
  // Predicated region
  $region18: #{lstm_classifier_forward.1} parent=0 // pred_check
    _
  $region19: #{lstm_classifier_forward.1} parent=0 // pred_check_branch
    %21 = sbr.rel (0) target = $region21
  $region20: #{lstm_classifier_forward.1} parent=0 // pred_region
    _
  $region21: #{lstm_classifier_forward.1} parent=0 // pred_fallthru
    _
  // Predicated region
  $region22: #{lstm_classifier_forward.1} parent=0 // pred_check
    _
  $region23: #{lstm_classifier_forward.1} parent=0 // pred_check_branch
    %23 = sbr.rel (0) target = $region25
  $region24: #{lstm_classifier_forward.1} parent=0 // pred_region
    _
  $region25: #{lstm_classifier_forward.1} parent=0 // pred_fallthru
    _
  // Predicated region
  $region26: #{lstm_classifier_forward.1} parent=0 // pred_check
    _
  $region27: #{lstm_classifier_forward.1} parent=0 // pred_check_branch
    %25 = sbr.rel (0) target = $region29
  $region28: #{lstm_classifier_forward.1} parent=0 // pred_region
    _
  $region29: #{lstm_classifier_forward.1} parent=0 // pred_fallthru
    _
  %v27 = vld [vmem:[%s0] sm:$0xff]
  %v28 = vld [vmem:[%s0 + $0x8] sm:$0xff]
  %v29 = vld [vmem:[%s0 + $0x10] sm:$0xff]
  %v30 = vld [vmem:[%s0 + $0x18] sm:$0xff]
  %v31 = vld [vmem:[%s0 + $0x20] sm:$0xff]
  %v32 = vld [vmem:[%s0 + $0x28] sm:$0xff]
  %v33 = vld [vmem:[%s0 + $0x30] sm:$0xff]
  %v34 = vld [vmem:[%s0 + $0x38] sm:$0xff]
  %v35 = vld [vmem:[%s1] sm:$0xf]
  %v36 = vld [vmem:[%s1 + $0x4] sm:$0xf]
  %v37 = vld [vmem:[%s1 + $0x8] sm:$0xf]
  %v38 = vld [vmem:[%s1 + $0xc] sm:$0xf]
  %v39 = vld [vmem:[%s1 + $0x10] sm:$0xf]
  %v40 = vld [vmem:[%s1 + $0x14] sm:$0xf]
  %v41 = vld [vmem:[%s1 + $0x18] sm:$0xf]
  %v42 = vld [vmem:[%s1 + $0x1c] sm:$0xf]
  %v43 = vld [vmem:[%s1 + $0x20] sm:$0xf]
  %v44 = vld [vmem:[%s1 + $0x24] sm:$0xf]
  %v45 = vld [vmem:[%s1 + $0x28] sm:$0xf]
  %v46 = vld [vmem:[%s1 + $0x2c] sm:$0xf]
  %v47 = vld [vmem:[%s1 + $0x30] sm:$0xf]
  %v48 = vld [vmem:[%s1 + $0x34] sm:$0xf]
  %v49 = vld [vmem:[%s1 + $0x38] sm:$0xf]
  %v50 = vld [vmem:[%s1 + $0x3c] sm:$0xf]
  %v51 = vld [vmem:[%s3] sm:$0xf]
  %v52 = vld [vmem:[%s3 + $0x4] sm:$0xf]
  %v53 = vld [vmem:[%s3 + $0x8] sm:$0xf]
  %v54 = vld [vmem:[%s3 + $0xc] sm:$0xf]
  %v55 = vld [vmem:[%s3 + $0x10] sm:$0xf]
  %v56 = vld [vmem:[%s3 + $0x14] sm:$0xf]
  %v57 = vld [vmem:[%s3 + $0x18] sm:$0xf]
  %v58 = vld [vmem:[%s3 + $0x1c] sm:$0xf]
  %v59 = vld [vmem:[%s3 + $0x20] sm:$0xf]
  %v60 = vld [vmem:[%s3 + $0x24] sm:$0xf]
  %v61 = vld [vmem:[%s3 + $0x28] sm:$0xf]
  %v62 = vld [vmem:[%s3 + $0x2c] sm:$0xf]
  %v63 = vld [vmem:[%s3 + $0x30] sm:$0xf]
  %v64 = vld [vmem:[%s3 + $0x34] sm:$0xf]
  %v65 = vld [vmem:[%s3 + $0x38] sm:$0xf]
  %v66 = vld [vmem:[%s3 + $0x3c] sm:$0xf]
  %v67 = vld [vmem:[%s2] sm:$0xf]
  %v68 = vld [vmem:[%s2 + $0x4] sm:$0xf]
  %v69 = vld [vmem:[%s2 + $0x8] sm:$0xf]
  %v70 = vld [vmem:[%s2 + $0xc] sm:$0xf]
  %v71 = vld [vmem:[%s2 + $0x10] sm:$0xf]
  %v72 = vld [vmem:[%s2 + $0x14] sm:$0xf]
  %v73 = vld [vmem:[%s2 + $0x18] sm:$0xf]
  %v74 = vld [vmem:[%s2 + $0x1c] sm:$0xf]
  %v75 = vld [vmem:[%s2 + $0x20] sm:$0xf]
  %v76 = vld [vmem:[%s2 + $0x24] sm:$0xf]
  %v77 = vld [vmem:[%s2 + $0x28] sm:$0xf]
  %v78 = vld [vmem:[%s2 + $0x2c] sm:$0xf]
  %v79 = vld [vmem:[%s2 + $0x30] sm:$0xf]
  %v80 = vld [vmem:[%s2 + $0x34] sm:$0xf]
  %v81 = vld [vmem:[%s2 + $0x38] sm:$0xf]
  %v82 = vld [vmem:[%s2 + $0x3c] sm:$0xf]
  %v83 = vld [vmem:[%s4] sm:$0x1]
  %v84 = vld [vmem:[%s5] sm:$0xf]
  %v85 = vld [vmem:[%s5 + $0x4] sm:$0xf]
  %v86 = vld [vmem:[%s5 + $0x8] sm:$0xf]
  %v87 = vld [vmem:[%s5 + $0xc] sm:$0xf]
  %v88 = vld [vmem:[%s5 + $0x10] sm:$0xf]
  %v89 = vld [vmem:[%s5 + $0x14] sm:$0xf]
  %v90 = vld [vmem:[%s5 + $0x18] sm:$0xf]
  %v91 = vld [vmem:[%s5 + $0x1c] sm:$0xf]
  %v92 = vld [vmem:[%s5 + $0x20] sm:$0xf]
  %v93 = vld [vmem:[%s5 + $0x24] sm:$0xf]
  %v94 = vld [vmem:[%s5 + $0x28] sm:$0xf]
  %v95 = vld [vmem:[%s5 + $0x2c] sm:$0xf]
  %v96 = vld [vmem:[%s5 + $0x30] sm:$0xf]
  %v97 = vld [vmem:[%s5 + $0x34] sm:$0xf]
  %v98 = vld [vmem:[%s5 + $0x38] sm:$0xf]
  %v99 = vld [vmem:[%s5 + $0x3c] sm:$0xf]
  %v100 = vld [vmem:[%s6] sm:$0x1]
  %v117 = vunpack.c.l.b16 %v35
  %v118 = vunpack.c.l.b16 %v36
  %v119 = vunpack.c.l.b16 %v37
  %v120 = vunpack.c.l.b16 %v38
  %v121 = vunpack.c.l.b16 %v39
  %v122 = vunpack.c.l.b16 %v40
  %v123 = vunpack.c.l.b16 %v41
  %v124 = vunpack.c.l.b16 %v42
  %v125 = vunpack.c.l.b16 %v43
  %v126 = vunpack.c.l.b16 %v44
  %v127 = vunpack.c.l.b16 %v45
  %v128 = vunpack.c.l.b16 %v46
  %v129 = vunpack.c.l.b16 %v47
  %v130 = vunpack.c.l.b16 %v48
  %v131 = vunpack.c.l.b16 %v49
  %v132 = vunpack.c.l.b16 %v50
  %v133 = vpack.c.b16 %v118, %v117
  %v134 = vpack.c.b16 %v120, %v119
  %v135 = vpack.c.b16 %v122, %v121
  %v136 = vpack.c.b16 %v124, %v123
  %v137 = vpack.c.b16 %v126, %v125
  %v138 = vpack.c.b16 %v128, %v127
  %v139 = vpack.c.b16 %v130, %v129
  %v140 = vpack.c.b16 %v132, %v131
  %149 = vmatprep.subr.bf16.mxu0 0
  %150 = vmatpush1.bf16.msra.mxu0 %v133
  %151 = vmatprep.subr.bf16.mxu0 0
  %152 = vmatpush1.bf16.msra.mxu0 %v134
  %153 = vmatprep.subr.bf16.mxu0 0
  %154 = vmatpush1.bf16.msra.mxu0 %v135
  %155 = vmatprep.subr.bf16.mxu0 0
  %156 = vmatpush1.bf16.msra.mxu0 %v136
  %157 = vmatprep.subr.bf16.mxu0 0
  %158 = vmatpush1.bf16.msra.mxu0 %v137
  %159 = vmatprep.subr.bf16.mxu0 0
  %160 = vmatpush1.bf16.msra.mxu0 %v138
  %161 = vmatprep.subr.bf16.mxu0 0
  %162 = vmatpush1.bf16.msra.mxu0 %v139
  %163 = vmatprep.subr.bf16.mxu0 0
  %164 = vmatpush1.bf16.msra.mxu0 %v140
  %165 = vmatprep.subr.bf16.mxu0 0
  %166 = vmatpush1.bf16.msra.mxu0 0
  %167 = vmatprep.subr.bf16.mxu0 0
  %168 = vmatpush1.bf16.msra.mxu0 0
  %169 = vmatprep.subr.bf16.mxu0 0
  %170 = vmatpush1.bf16.msra.mxu0 0
  %171 = vmatprep.subr.bf16.mxu0 0
  %172 = vmatpush1.bf16.msra.mxu0 0
  %173 = vmatprep.subr.bf16.mxu0 0
  %174 = vmatpush1.bf16.msra.mxu0 0
  %175 = vmatprep.subr.bf16.mxu0 0
  %176 = vmatpush1.bf16.msra.mxu0 0
  %177 = vmatprep.subr.bf16.mxu0 0
  %178 = vmatpush1.bf16.msra.mxu0 0
  %179 = vmatprep.subr.bf16.mxu0 0
  %180 = vmatpush1.bf16.msra.mxu0 0
  %181 = vmatprep.mubr.bf16.mxu0 0
  %182 = vmatmul.mubr.bf16.gmra.mrb[0].mxu0 0
  %v183 = vpop.f32.mrb[0].mxu0
  %v184 = vadd.f32 0.0, %v183
  %v185 = vpop.f32.mrb[0].mxu0
  %v186 = vpop.f32.mrb[0].mxu0
  %v187 = vpop.f32.mrb[0].mxu0
  %188 = vdwg.mxu0
  %v189 = vadd.f32 %v27, %v184
  %v190 = vxor.u32 %v189, 2147483648
  %v191 = vmul.f32 %v190, 1.442695
  %v192 = vpow.pop %v191
  %v193 = vadd.f32 %v192, 1.0
  %v194 = vrcp.pop %v193
  %v195 = vmul.f32 1.0, %v194
  %v196 = vtanh.pop %v189
  %v197 = vmul.f32 %v195, 0.0
  %199 = vrot.lane.b32.xlu0 %v196, 32
  %v200 = vpop.permute.xlu0 %199
  %v202 = vmul.f32 %v195, %v200
  %204 = vrot.lane.b32.xlu0 %v202, 32
  %v205 = vpop.permute.xlu0 %204
  %v207 = vadd.f32 %v197, %v205
  %v208 = vtanh.pop %v207
  %210 = vrot.lane.b32.xlu0 %v208, 32
  %v211 = vpop.permute.xlu0 %210
  %v213 = vmul.f32 %v195, %v211
  %215 = vrot.lane.b32.xlu0 %v213, 64
  %v216 = vpop.permute.xlu0 %215
  %vm218 = vcmask 261120
  %v219 = vsel %vm218, %v216, 0.0
  %v220 = vpack.c.bf16 %v219, %v219
  %v222 = vlaneseq
  %v223 = vshrl.u32 %v222, 7
  %v224 = vsub.s32 0, %v223
  %v225 = vrot.slane %v83, %v224
  %v243 = vunpack.c.l.b16 %v67
  %v244 = vunpack.c.l.b16 %v68
  %v245 = vunpack.c.l.b16 %v69
  %v246 = vunpack.c.l.b16 %v70
  %v247 = vunpack.c.l.b16 %v71
  %v248 = vunpack.c.l.b16 %v72
  %v249 = vunpack.c.l.b16 %v73
  %v250 = vunpack.c.l.b16 %v74
  %v251 = vunpack.c.l.b16 %v75
  %v252 = vunpack.c.l.b16 %v76
  %v253 = vunpack.c.l.b16 %v77
  %v254 = vunpack.c.l.b16 %v78
  %v255 = vunpack.c.l.b16 %v79
  %v256 = vunpack.c.l.b16 %v80
  %v257 = vunpack.c.l.b16 %v81
  %v258 = vunpack.c.l.b16 %v82
  %v259 = vpack.c.b16 %v244, %v243
  %v260 = vpack.c.b16 %v246, %v245
  %v261 = vpack.c.b16 %v248, %v247
  %v262 = vpack.c.b16 %v250, %v249
  %v263 = vpack.c.b16 %v252, %v251
  %v264 = vpack.c.b16 %v254, %v253
  %v265 = vpack.c.b16 %v256, %v255
  %v266 = vpack.c.b16 %v258, %v257
  %275 = vmatprep.subr.bf16.mxu0 0
  %276 = vmatpush1.bf16.msra.mxu0 %v259
  %277 = vmatprep.subr.bf16.mxu0 0
  %278 = vmatpush1.bf16.msra.mxu0 %v260
  %279 = vmatprep.subr.bf16.mxu0 0
  %280 = vmatpush1.bf16.msra.mxu0 %v261
  %281 = vmatprep.subr.bf16.mxu0 0
  %282 = vmatpush1.bf16.msra.mxu0 %v262
  %283 = vmatprep.subr.bf16.mxu0 0
  %284 = vmatpush1.bf16.msra.mxu0 %v263
  %285 = vmatprep.subr.bf16.mxu0 0
  %286 = vmatpush1.bf16.msra.mxu0 %v264
  %287 = vmatprep.subr.bf16.mxu0 0
  %288 = vmatpush1.bf16.msra.mxu0 %v265
  %289 = vmatprep.subr.bf16.mxu0 0
  %290 = vmatpush1.bf16.msra.mxu0 %v266
  %291 = vmatprep.subr.bf16.mxu0 0
  %292 = vmatpush1.bf16.msra.mxu0 0
  %293 = vmatprep.subr.bf16.mxu0 0
  %294 = vmatpush1.bf16.msra.mxu0 0
  %295 = vmatprep.subr.bf16.mxu0 0
  %296 = vmatpush1.bf16.msra.mxu0 0
  %297 = vmatprep.subr.bf16.mxu0 0
  %298 = vmatpush1.bf16.msra.mxu0 0
  %299 = vmatprep.subr.bf16.mxu0 0
  %300 = vmatpush1.bf16.msra.mxu0 0
  %301 = vmatprep.subr.bf16.mxu0 0
  %302 = vmatpush1.bf16.msra.mxu0 0
  %303 = vmatprep.subr.bf16.mxu0 0
  %304 = vmatpush1.bf16.msra.mxu0 0
  %305 = vmatprep.subr.bf16.mxu0 0
  %306 = vmatpush1.bf16.msra.mxu0 0
  %307 = vmatprep.mubr.bf16.mxu0 0
  %308 = vmatmul.mubr.bf16.gmra.mrb[0].mxu0 %v220
  %v309 = vpop.f32.mrb[0].mxu0
  %v310 = vadd.f32 %v225, %v309
  %v311 = vpop.f32.mrb[0].mxu0
  %v312 = vpop.f32.mrb[0].mxu0
  %v313 = vpop.f32.mrb[0].mxu0
  %314 = vdwg.mxu0
  %v331 = vunpack.c.l.b16 %v51
  %v332 = vunpack.c.l.b16 %v52
  %v333 = vunpack.c.l.b16 %v53
  %v334 = vunpack.c.l.b16 %v54
  %v335 = vunpack.c.l.b16 %v55
  %v336 = vunpack.c.l.b16 %v56
  %v337 = vunpack.c.l.b16 %v57
  %v338 = vunpack.c.l.b16 %v58
  %v339 = vunpack.c.l.b16 %v59
  %v340 = vunpack.c.l.b16 %v60
  %v341 = vunpack.c.l.b16 %v61
  %v342 = vunpack.c.l.b16 %v62
  %v343 = vunpack.c.l.b16 %v63
  %v344 = vunpack.c.l.b16 %v64
  %v345 = vunpack.c.l.b16 %v65
  %v346 = vunpack.c.l.b16 %v66
  %v347 = vpack.c.b16 %v332, %v331
  %v348 = vpack.c.b16 %v334, %v333
  %v349 = vpack.c.b16 %v336, %v335
  %v350 = vpack.c.b16 %v338, %v337
  %v351 = vpack.c.b16 %v340, %v339
  %v352 = vpack.c.b16 %v342, %v341
  %v353 = vpack.c.b16 %v344, %v343
  %v354 = vpack.c.b16 %v346, %v345
  %363 = vmatprep.subr.bf16.mxu0 0
  %364 = vmatpush1.bf16.msra.mxu0 %v347
  %365 = vmatprep.subr.bf16.mxu0 0
  %366 = vmatpush1.bf16.msra.mxu0 %v348
  %367 = vmatprep.subr.bf16.mxu0 0
  %368 = vmatpush1.bf16.msra.mxu0 %v349
  %369 = vmatprep.subr.bf16.mxu0 0
  %370 = vmatpush1.bf16.msra.mxu0 %v350
  %371 = vmatprep.subr.bf16.mxu0 0
  %372 = vmatpush1.bf16.msra.mxu0 %v351
  %373 = vmatprep.subr.bf16.mxu0 0
  %374 = vmatpush1.bf16.msra.mxu0 %v352
  %375 = vmatprep.subr.bf16.mxu0 0
  %376 = vmatpush1.bf16.msra.mxu0 %v353
  %377 = vmatprep.subr.bf16.mxu0 0
  %378 = vmatpush1.bf16.msra.mxu0 %v354
  %379 = vmatprep.subr.bf16.mxu0 0
  %380 = vmatpush1.bf16.msra.mxu0 0
  %381 = vmatprep.subr.bf16.mxu0 0
  %382 = vmatpush1.bf16.msra.mxu0 0
  %383 = vmatprep.subr.bf16.mxu0 0
  %384 = vmatpush1.bf16.msra.mxu0 0
  %385 = vmatprep.subr.bf16.mxu0 0
  %386 = vmatpush1.bf16.msra.mxu0 0
  %387 = vmatprep.subr.bf16.mxu0 0
  %388 = vmatpush1.bf16.msra.mxu0 0
  %389 = vmatprep.subr.bf16.mxu0 0
  %390 = vmatpush1.bf16.msra.mxu0 0
  %391 = vmatprep.subr.bf16.mxu0 0
  %392 = vmatpush1.bf16.msra.mxu0 0
  %393 = vmatprep.subr.bf16.mxu0 0
  %394 = vmatpush1.bf16.msra.mxu0 0
  %395 = vmatprep.mubr.bf16.mxu0 0
  %396 = vmatmul.mubr.bf16.gmra.mrb[0].mxu0 0
  %v397 = vpop.f32.mrb[0].mxu0
  %v398 = vadd.f32 0.0, %v397
  %v399 = vpop.f32.mrb[0].mxu0
  %v400 = vpop.f32.mrb[0].mxu0
  %v401 = vpop.f32.mrb[0].mxu0
  %402 = vdwg.mxu0
  %v403 = vadd.f32 %v310, %v398
  %v404 = vxor.u32 %v403, 2147483648
  %v405 = vmul.f32 %v404, 1.442695
  %v406 = vpow.pop %v405
  %v407 = vadd.f32 %v406, 1.0
  %v408 = vrcp.pop %v407
  %v409 = vmul.f32 1.0, %v408
  %v410 = vtanh.pop %v403
  %v411 = vmul.f32 %v409, 0.0
  %413 = vrot.lane.b32.xlu0 %v410, 32
  %v414 = vpop.permute.xlu0 %413
  %v416 = vmul.f32 %v409, %v414
  %418 = vrot.lane.b32.xlu0 %v416, 32
  %v419 = vpop.permute.xlu0 %418
  %v421 = vadd.f32 %v411, %v419
  %v422 = vtanh.pop %v421
  %424 = vrot.lane.b32.xlu0 %v422, 32
  %v425 = vpop.permute.xlu0 %424
  %v427 = vmul.f32 %v409, %v425
  %429 = vrot.lane.b32.xlu0 %v427, 64
  %v430 = vpop.permute.xlu0 %429
  %v432 = vsel %vm218, %v430, 0.0
  %v433 = vpack.c.bf16 %v432, %v432
  %434 = vmatprep.subr.bf16.mxu0 0
  %435 = vmatpush1.bf16.msra.mxu0 %v133
  %436 = vmatprep.subr.bf16.mxu0 0
  %437 = vmatpush1.bf16.msra.mxu0 %v134
  %438 = vmatprep.subr.bf16.mxu0 0
  %439 = vmatpush1.bf16.msra.mxu0 %v135
  %440 = vmatprep.subr.bf16.mxu0 0
  %441 = vmatpush1.bf16.msra.mxu0 %v136
  %442 = vmatprep.subr.bf16.mxu0 0
  %443 = vmatpush1.bf16.msra.mxu0 %v137
  %444 = vmatprep.subr.bf16.mxu0 0
  %445 = vmatpush1.bf16.msra.mxu0 %v138
  %446 = vmatprep.subr.bf16.mxu0 0
  %447 = vmatpush1.bf16.msra.mxu0 %v139
  %448 = vmatprep.subr.bf16.mxu0 0
  %449 = vmatpush1.bf16.msra.mxu0 %v140
  %450 = vmatprep.subr.bf16.mxu0 0
  %451 = vmatpush1.bf16.msra.mxu0 0
  %452 = vmatprep.subr.bf16.mxu0 0
  %453 = vmatpush1.bf16.msra.mxu0 0
  %454 = vmatprep.subr.bf16.mxu0 0
  %455 = vmatpush1.bf16.msra.mxu0 0
  %456 = vmatprep.subr.bf16.mxu0 0
  %457 = vmatpush1.bf16.msra.mxu0 0
  %458 = vmatprep.subr.bf16.mxu0 0
  %459 = vmatpush1.bf16.msra.mxu0 0
  %460 = vmatprep.subr.bf16.mxu0 0
  %461 = vmatpush1.bf16.msra.mxu0 0
  %462 = vmatprep.subr.bf16.mxu0 0
  %463 = vmatpush1.bf16.msra.mxu0 0
  %464 = vmatprep.subr.bf16.mxu0 0
  %465 = vmatpush1.bf16.msra.mxu0 0
  %466 = vmatprep.mubr.bf16.mxu0 0
  %467 = vmatmul.mubr.bf16.gmra.mrb[0].mxu0 %v220
  %v468 = vpop.f32.mrb[0].mxu0
  %v469 = vadd.f32 0.0, %v468
  %v470 = vpop.f32.mrb[0].mxu0
  %v471 = vpop.f32.mrb[0].mxu0
  %v472 = vpop.f32.mrb[0].mxu0
  %473 = vdwg.mxu0
  %v474 = vadd.f32 %v28, %v469
  %v475 = vxor.u32 %v474, 2147483648
  %v476 = vmul.f32 %v475, 1.442695
  %v477 = vpow.pop %v476
  %v478 = vadd.f32 %v477, 1.0
  %v479 = vrcp.pop %v478
  %v480 = vmul.f32 1.0, %v479
  %v481 = vtanh.pop %v474
  %v482 = vmul.f32 %v480, %v207
  %484 = vrot.lane.b32.xlu0 %v481, 32
  %v485 = vpop.permute.xlu0 %484
  %v487 = vmul.f32 %v480, %v485
  %489 = vrot.lane.b32.xlu0 %v487, 32
  %v490 = vpop.permute.xlu0 %489
  %v492 = vadd.f32 %v482, %v490
  %v493 = vtanh.pop %v492
  %495 = vrot.lane.b32.xlu0 %v493, 32
  %v496 = vpop.permute.xlu0 %495
  %v498 = vmul.f32 %v480, %v496
  %500 = vrot.lane.b32.xlu0 %v498, 64
  %v501 = vpop.permute.xlu0 %500
  %v503 = vsel %vm218, %v501, 0.0
  %v504 = vpack.c.bf16 %v503, %v503
  %505 = vmatprep.subr.bf16.mxu0 0
  %506 = vmatpush1.bf16.msra.mxu0 %v259
  %507 = vmatprep.subr.bf16.mxu0 0
  %508 = vmatpush1.bf16.msra.mxu0 %v260
  %509 = vmatprep.subr.bf16.mxu0 0
  %510 = vmatpush1.bf16.msra.mxu0 %v261
  %511 = vmatprep.subr.bf16.mxu0 0
  %512 = vmatpush1.bf16.msra.mxu0 %v262
  %513 = vmatprep.subr.bf16.mxu0 0
  %514 = vmatpush1.bf16.msra.mxu0 %v263
  %515 = vmatprep.subr.bf16.mxu0 0
  %516 = vmatpush1.bf16.msra.mxu0 %v264
  %517 = vmatprep.subr.bf16.mxu0 0
  %518 = vmatpush1.bf16.msra.mxu0 %v265
  %519 = vmatprep.subr.bf16.mxu0 0
  %520 = vmatpush1.bf16.msra.mxu0 %v266
  %521 = vmatprep.subr.bf16.mxu0 0
  %522 = vmatpush1.bf16.msra.mxu0 0
  %523 = vmatprep.subr.bf16.mxu0 0
  %524 = vmatpush1.bf16.msra.mxu0 0
  %525 = vmatprep.subr.bf16.mxu0 0
  %526 = vmatpush1.bf16.msra.mxu0 0
  %527 = vmatprep.subr.bf16.mxu0 0
  %528 = vmatpush1.bf16.msra.mxu0 0
  %529 = vmatprep.subr.bf16.mxu0 0
  %530 = vmatpush1.bf16.msra.mxu0 0
  %531 = vmatprep.subr.bf16.mxu0 0
  %532 = vmatpush1.bf16.msra.mxu0 0
  %533 = vmatprep.subr.bf16.mxu0 0
  %534 = vmatpush1.bf16.msra.mxu0 0
  %535 = vmatprep.subr.bf16.mxu0 0
  %536 = vmatpush1.bf16.msra.mxu0 0
  %537 = vmatprep.mubr.bf16.mxu0 0
  %538 = vmatmul.mubr.bf16.gmra.mrb[0].mxu0 %v504
  %v539 = vpop.f32.mrb[0].mxu0
  %v540 = vadd.f32 %v225, %v539
  %v541 = vpop.f32.mrb[0].mxu0
  %v542 = vpop.f32.mrb[0].mxu0
  %v543 = vpop.f32.mrb[0].mxu0
  %544 = vdwg.mxu0
  %545 = vmatprep.subr.bf16.mxu0 0
  %546 = vmatpush1.bf16.msra.mxu0 %v347
  %547 = vmatprep.subr.bf16.mxu0 0
  %548 = vmatpush1.bf16.msra.mxu0 %v348
  %549 = vmatprep.subr.bf16.mxu0 0
  %550 = vmatpush1.bf16.msra.mxu0 %v349
  %551 = vmatprep.subr.bf16.mxu0 0
  %552 = vmatpush1.bf16.msra.mxu0 %v350
  %553 = vmatprep.subr.bf16.mxu0 0
  %554 = vmatpush1.bf16.msra.mxu0 %v351
  %555 = vmatprep.subr.bf16.mxu0 0
  %556 = vmatpush1.bf16.msra.mxu0 %v352
  %557 = vmatprep.subr.bf16.mxu0 0
  %558 = vmatpush1.bf16.msra.mxu0 %v353
  %559 = vmatprep.subr.bf16.mxu0 0
  %560 = vmatpush1.bf16.msra.mxu0 %v354
  %561 = vmatprep.subr.bf16.mxu0 0
  %562 = vmatpush1.bf16.msra.mxu0 0
  %563 = vmatprep.subr.bf16.mxu0 0
  %564 = vmatpush1.bf16.msra.mxu0 0
  %565 = vmatprep.subr.bf16.mxu0 0
  %566 = vmatpush1.bf16.msra.mxu0 0
  %567 = vmatprep.subr.bf16.mxu0 0
  %568 = vmatpush1.bf16.msra.mxu0 0
  %569 = vmatprep.subr.bf16.mxu0 0
  %570 = vmatpush1.bf16.msra.mxu0 0
  %571 = vmatprep.subr.bf16.mxu0 0
  %572 = vmatpush1.bf16.msra.mxu0 0
  %573 = vmatprep.subr.bf16.mxu0 0
  %574 = vmatpush1.bf16.msra.mxu0 0
  %575 = vmatprep.subr.bf16.mxu0 0
  %576 = vmatpush1.bf16.msra.mxu0 0
  %577 = vmatprep.mubr.bf16.mxu0 0
  %578 = vmatmul.mubr.bf16.gmra.mrb[0].mxu0 %v433
  %v579 = vpop.f32.mrb[0].mxu0
  %v580 = vadd.f32 0.0, %v579
  %v581 = vpop.f32.mrb[0].mxu0
  %v582 = vpop.f32.mrb[0].mxu0
  %v583 = vpop.f32.mrb[0].mxu0
  %584 = vdwg.mxu0
  %v585 = vadd.f32 %v540, %v580
  %v586 = vxor.u32 %v585, 2147483648
  %v587 = vmul.f32 %v586, 1.442695
  %v588 = vpow.pop %v587
  %v589 = vadd.f32 %v588, 1.0
  %v590 = vrcp.pop %v589
  %v591 = vmul.f32 1.0, %v590
  %v592 = vtanh.pop %v585
  %v593 = vmul.f32 %v591, %v421
  %595 = vrot.lane.b32.xlu0 %v592, 32
  %v596 = vpop.permute.xlu0 %595
  %v598 = vmul.f32 %v591, %v596
  %600 = vrot.lane.b32.xlu0 %v598, 32
  %v601 = vpop.permute.xlu0 %600
  %v603 = vadd.f32 %v593, %v601
  %v604 = vtanh.pop %v603
  %606 = vrot.lane.b32.xlu0 %v604, 32
  %v607 = vpop.permute.xlu0 %606
  %v609 = vmul.f32 %v591, %v607
  %611 = vrot.lane.b32.xlu0 %v609, 64
  %v612 = vpop.permute.xlu0 %611
  %v614 = vsel %vm218, %v612, 0.0
  %v615 = vpack.c.bf16 %v614, %v614
  %616 = vmatprep.subr.bf16.mxu0 0
  %617 = vmatpush1.bf16.msra.mxu0 %v133
  %618 = vmatprep.subr.bf16.mxu0 0
  %619 = vmatpush1.bf16.msra.mxu0 %v134
  %620 = vmatprep.subr.bf16.mxu0 0
  %621 = vmatpush1.bf16.msra.mxu0 %v135
  %622 = vmatprep.subr.bf16.mxu0 0
  %623 = vmatpush1.bf16.msra.mxu0 %v136
  %624 = vmatprep.subr.bf16.mxu0 0
  %625 = vmatpush1.bf16.msra.mxu0 %v137
  %626 = vmatprep.subr.bf16.mxu0 0
  %627 = vmatpush1.bf16.msra.mxu0 %v138
  %628 = vmatprep.subr.bf16.mxu0 0
  %629 = vmatpush1.bf16.msra.mxu0 %v139
  %630 = vmatprep.subr.bf16.mxu0 0
  %631 = vmatpush1.bf16.msra.mxu0 %v140
  %632 = vmatprep.subr.bf16.mxu0 0
  %633 = vmatpush1.bf16.msra.mxu0 0
  %634 = vmatprep.subr.bf16.mxu0 0
  %635 = vmatpush1.bf16.msra.mxu0 0
  %636 = vmatprep.subr.bf16.mxu0 0
  %637 = vmatpush1.bf16.msra.mxu0 0
  %638 = vmatprep.subr.bf16.mxu0 0
  %639 = vmatpush1.bf16.msra.mxu0 0
  %640 = vmatprep.subr.bf16.mxu0 0
  %641 = vmatpush1.bf16.msra.mxu0 0
  %642 = vmatprep.subr.bf16.mxu0 0
  %643 = vmatpush1.bf16.msra.mxu0 0
  %644 = vmatprep.subr.bf16.mxu0 0
  %645 = vmatpush1.bf16.msra.mxu0 0
  %646 = vmatprep.subr.bf16.mxu0 0
  %647 = vmatpush1.bf16.msra.mxu0 0
  %648 = vmatprep.mubr.bf16.mxu0 0
  %649 = vmatmul.mubr.bf16.gmra.mrb[0].mxu0 %v504
  %v650 = vpop.f32.mrb[0].mxu0
  %v651 = vadd.f32 0.0, %v650
  %v652 = vpop.f32.mrb[0].mxu0
  %v653 = vpop.f32.mrb[0].mxu0
  %v654 = vpop.f32.mrb[0].mxu0
  %655 = vdwg.mxu0
  %v656 = vadd.f32 %v29, %v651
  %v657 = vxor.u32 %v656, 2147483648
  %v658 = vmul.f32 %v657, 1.442695
  %v659 = vpow.pop %v658
  %v660 = vadd.f32 %v659, 1.0
  %v661 = vrcp.pop %v660
  %v662 = vmul.f32 1.0, %v661
  %v663 = vtanh.pop %v656
  %v664 = vmul.f32 %v662, %v492
  %666 = vrot.lane.b32.xlu0 %v663, 32
  %v667 = vpop.permute.xlu0 %666
  %v669 = vmul.f32 %v662, %v667
  %671 = vrot.lane.b32.xlu0 %v669, 32
  %v672 = vpop.permute.xlu0 %671
  %v674 = vadd.f32 %v664, %v672
  %v675 = vtanh.pop %v674
  %677 = vrot.lane.b32.xlu0 %v675, 32
  %v678 = vpop.permute.xlu0 %677
  %v680 = vmul.f32 %v662, %v678
  %682 = vrot.lane.b32.xlu0 %v680, 64
  %v683 = vpop.permute.xlu0 %682
  %v685 = vsel %vm218, %v683, 0.0
  %v686 = vpack.c.bf16 %v685, %v685
  %687 = vmatprep.subr.bf16.mxu0 0
  %688 = vmatpush1.bf16.msra.mxu0 %v259
  %689 = vmatprep.subr.bf16.mxu0 0
  %690 = vmatpush1.bf16.msra.mxu0 %v260
  %691 = vmatprep.subr.bf16.mxu0 0
  %692 = vmatpush1.bf16.msra.mxu0 %v261
  %693 = vmatprep.subr.bf16.mxu0 0
  %694 = vmatpush1.bf16.msra.mxu0 %v262
  %695 = vmatprep.subr.bf16.mxu0 0
  %696 = vmatpush1.bf16.msra.mxu0 %v263
  %697 = vmatprep.subr.bf16.mxu0 0
  %698 = vmatpush1.bf16.msra.mxu0 %v264
  %699 = vmatprep.subr.bf16.mxu0 0
  %700 = vmatpush1.bf16.msra.mxu0 %v265
  %701 = vmatprep.subr.bf16.mxu0 0
  %702 = vmatpush1.bf16.msra.mxu0 %v266
  %703 = vmatprep.subr.bf16.mxu0 0
  %704 = vmatpush1.bf16.msra.mxu0 0
  %705 = vmatprep.subr.bf16.mxu0 0
  %706 = vmatpush1.bf16.msra.mxu0 0
  %707 = vmatprep.subr.bf16.mxu0 0
  %708 = vmatpush1.bf16.msra.mxu0 0
  %709 = vmatprep.subr.bf16.mxu0 0
  %710 = vmatpush1.bf16.msra.mxu0 0
  %711 = vmatprep.subr.bf16.mxu0 0
  %712 = vmatpush1.bf16.msra.mxu0 0
  %713 = vmatprep.subr.bf16.mxu0 0
  %714 = vmatpush1.bf16.msra.mxu0 0
  %715 = vmatprep.subr.bf16.mxu0 0
  %716 = vmatpush1.bf16.msra.mxu0 0
  %717 = vmatprep.subr.bf16.mxu0 0
  %718 = vmatpush1.bf16.msra.mxu0 0
  %719 = vmatprep.mubr.bf16.mxu0 0
  %720 = vmatmul.mubr.bf16.gmra.mrb[0].mxu0 %v686
  %v721 = vpop.f32.mrb[0].mxu0
  %v722 = vadd.f32 %v225, %v721
  %v723 = vpop.f32.mrb[0].mxu0
  %v724 = vpop.f32.mrb[0].mxu0
  %v725 = vpop.f32.mrb[0].mxu0
  %726 = vdwg.mxu0
  %727 = vmatprep.subr.bf16.mxu0 0
  %728 = vmatpush1.bf16.msra.mxu0 %v347
  %729 = vmatprep.subr.bf16.mxu0 0
  %730 = vmatpush1.bf16.msra.mxu0 %v348
  %731 = vmatprep.subr.bf16.mxu0 0
  %732 = vmatpush1.bf16.msra.mxu0 %v349
  %733 = vmatprep.subr.bf16.mxu0 0
  %734 = vmatpush1.bf16.msra.mxu0 %v350
  %735 = vmatprep.subr.bf16.mxu0 0
  %736 = vmatpush1.bf16.msra.mxu0 %v351
  %737 = vmatprep.subr.bf16.mxu0 0
  %738 = vmatpush1.bf16.msra.mxu0 %v352
  %739 = vmatprep.subr.bf16.mxu0 0
  %740 = vmatpush1.bf16.msra.mxu0 %v353
  %741 = vmatprep.subr.bf16.mxu0 0
  %742 = vmatpush1.bf16.msra.mxu0 %v354
  %743 = vmatprep.subr.bf16.mxu0 0
  %744 = vmatpush1.bf16.msra.mxu0 0
  %745 = vmatprep.subr.bf16.mxu0 0
  %746 = vmatpush1.bf16.msra.mxu0 0
  %747 = vmatprep.subr.bf16.mxu0 0
  %748 = vmatpush1.bf16.msra.mxu0 0
  %749 = vmatprep.subr.bf16.mxu0 0
  %750 = vmatpush1.bf16.msra.mxu0 0
  %751 = vmatprep.subr.bf16.mxu0 0
  %752 = vmatpush1.bf16.msra.mxu0 0
  %753 = vmatprep.subr.bf16.mxu0 0
  %754 = vmatpush1.bf16.msra.mxu0 0
  %755 = vmatprep.subr.bf16.mxu0 0
  %756 = vmatpush1.bf16.msra.mxu0 0
  %757 = vmatprep.subr.bf16.mxu0 0
  %758 = vmatpush1.bf16.msra.mxu0 0
  %759 = vmatprep.mubr.bf16.mxu0 0
  %760 = vmatmul.mubr.bf16.gmra.mrb[0].mxu0 %v615
  %v761 = vpop.f32.mrb[0].mxu0
  %v762 = vadd.f32 0.0, %v761
  %v763 = vpop.f32.mrb[0].mxu0
  %v764 = vpop.f32.mrb[0].mxu0
  %v765 = vpop.f32.mrb[0].mxu0
  %766 = vdwg.mxu0
  %v767 = vadd.f32 %v722, %v762
  %v768 = vxor.u32 %v767, 2147483648
  %v769 = vmul.f32 %v768, 1.442695
  %v770 = vpow.pop %v769
  %v771 = vadd.f32 %v770, 1.0
  %v772 = vrcp.pop %v771
  %v773 = vmul.f32 1.0, %v772
  %v774 = vtanh.pop %v767
  %v775 = vmul.f32 %v773, %v603
  %777 = vrot.lane.b32.xlu0 %v774, 32
  %v778 = vpop.permute.xlu0 %777
  %v780 = vmul.f32 %v773, %v778
  %782 = vrot.lane.b32.xlu0 %v780, 32
  %v783 = vpop.permute.xlu0 %782
  %v785 = vadd.f32 %v775, %v783
  %v786 = vtanh.pop %v785
  %788 = vrot.lane.b32.xlu0 %v786, 32
  %v789 = vpop.permute.xlu0 %788
  %v791 = vmul.f32 %v773, %v789
  %793 = vrot.lane.b32.xlu0 %v791, 64
  %v794 = vpop.permute.xlu0 %793
  %v796 = vsel %vm218, %v794, 0.0
  %v797 = vpack.c.bf16 %v796, %v796
  %798 = vmatprep.subr.bf16.mxu0 0
  %799 = vmatpush1.bf16.msra.mxu0 %v133
  %800 = vmatprep.subr.bf16.mxu0 0
  %801 = vmatpush1.bf16.msra.mxu0 %v134
  %802 = vmatprep.subr.bf16.mxu0 0
  %803 = vmatpush1.bf16.msra.mxu0 %v135
  %804 = vmatprep.subr.bf16.mxu0 0
  %805 = vmatpush1.bf16.msra.mxu0 %v136
  %806 = vmatprep.subr.bf16.mxu0 0
  %807 = vmatpush1.bf16.msra.mxu0 %v137
  %808 = vmatprep.subr.bf16.mxu0 0
  %809 = vmatpush1.bf16.msra.mxu0 %v138
  %810 = vmatprep.subr.bf16.mxu0 0
  %811 = vmatpush1.bf16.msra.mxu0 %v139
  %812 = vmatprep.subr.bf16.mxu0 0
  %813 = vmatpush1.bf16.msra.mxu0 %v140
  %814 = vmatprep.subr.bf16.mxu0 0
  %815 = vmatpush1.bf16.msra.mxu0 0
  %816 = vmatprep.subr.bf16.mxu0 0
  %817 = vmatpush1.bf16.msra.mxu0 0
  %818 = vmatprep.subr.bf16.mxu0 0
  %819 = vmatpush1.bf16.msra.mxu0 0
  %820 = vmatprep.subr.bf16.mxu0 0
  %821 = vmatpush1.bf16.msra.mxu0 0
  %822 = vmatprep.subr.bf16.mxu0 0
  %823 = vmatpush1.bf16.msra.mxu0 0
  %824 = vmatprep.subr.bf16.mxu0 0
  %825 = vmatpush1.bf16.msra.mxu0 0
  %826 = vmatprep.subr.bf16.mxu0 0
  %827 = vmatpush1.bf16.msra.mxu0 0
  %828 = vmatprep.subr.bf16.mxu0 0
  %829 = vmatpush1.bf16.msra.mxu0 0
  %830 = vmatprep.mubr.bf16.mxu0 0
  %831 = vmatmul.mubr.bf16.gmra.mrb[0].mxu0 %v686
  %v832 = vpop.f32.mrb[0].mxu0
  %v833 = vadd.f32 0.0, %v832
  %v834 = vpop.f32.mrb[0].mxu0
  %v835 = vpop.f32.mrb[0].mxu0
  %v836 = vpop.f32.mrb[0].mxu0
  %837 = vdwg.mxu0
  %v838 = vadd.f32 %v30, %v833
  %v839 = vxor.u32 %v838, 2147483648
  %v840 = vmul.f32 %v839, 1.442695
  %v841 = vpow.pop %v840
  %v842 = vadd.f32 %v841, 1.0
  %v843 = vrcp.pop %v842
  %v844 = vmul.f32 1.0, %v843
  %v845 = vtanh.pop %v838
  %v846 = vmul.f32 %v844, %v674
  %848 = vrot.lane.b32.xlu0 %v845, 32
  %v849 = vpop.permute.xlu0 %848
  %v851 = vmul.f32 %v844, %v849
  %853 = vrot.lane.b32.xlu0 %v851, 32
  %v854 = vpop.permute.xlu0 %853
  %v856 = vadd.f32 %v846, %v854
  %v857 = vtanh.pop %v856
  %859 = vrot.lane.b32.xlu0 %v857, 32
  %v860 = vpop.permute.xlu0 %859
  %v862 = vmul.f32 %v844, %v860
  %864 = vrot.lane.b32.xlu0 %v862, 64
  %v865 = vpop.permute.xlu0 %864
  %v867 = vsel %vm218, %v865, 0.0
  %v868 = vpack.c.bf16 %v867, %v867
  %869 = vmatprep.subr.bf16.mxu0 0
  %870 = vmatpush1.bf16.msra.mxu0 %v259
  %871 = vmatprep.subr.bf16.mxu0 0
  %872 = vmatpush1.bf16.msra.mxu0 %v260
  %873 = vmatprep.subr.bf16.mxu0 0
  %874 = vmatpush1.bf16.msra.mxu0 %v261
  %875 = vmatprep.subr.bf16.mxu0 0
  %876 = vmatpush1.bf16.msra.mxu0 %v262
  %877 = vmatprep.subr.bf16.mxu0 0
  %878 = vmatpush1.bf16.msra.mxu0 %v263
  %879 = vmatprep.subr.bf16.mxu0 0
  %880 = vmatpush1.bf16.msra.mxu0 %v264
  %881 = vmatprep.subr.bf16.mxu0 0
  %882 = vmatpush1.bf16.msra.mxu0 %v265
  %883 = vmatprep.subr.bf16.mxu0 0
  %884 = vmatpush1.bf16.msra.mxu0 %v266
  %885 = vmatprep.subr.bf16.mxu0 0
  %886 = vmatpush1.bf16.msra.mxu0 0
  %887 = vmatprep.subr.bf16.mxu0 0
  %888 = vmatpush1.bf16.msra.mxu0 0
  %889 = vmatprep.subr.bf16.mxu0 0
  %890 = vmatpush1.bf16.msra.mxu0 0
  %891 = vmatprep.subr.bf16.mxu0 0
  %892 = vmatpush1.bf16.msra.mxu0 0
  %893 = vmatprep.subr.bf16.mxu0 0
  %894 = vmatpush1.bf16.msra.mxu0 0
  %895 = vmatprep.subr.bf16.mxu0 0
  %896 = vmatpush1.bf16.msra.mxu0 0
  %897 = vmatprep.subr.bf16.mxu0 0
  %898 = vmatpush1.bf16.msra.mxu0 0
  %899 = vmatprep.subr.bf16.mxu0 0
  %900 = vmatpush1.bf16.msra.mxu0 0
  %901 = vmatprep.mubr.bf16.mxu0 0
  %902 = vmatmul.mubr.bf16.gmra.mrb[0].mxu0 %v868
  %v903 = vpop.f32.mrb[0].mxu0
  %v904 = vadd.f32 %v225, %v903
  %v905 = vpop.f32.mrb[0].mxu0
  %v906 = vpop.f32.mrb[0].mxu0
  %v907 = vpop.f32.mrb[0].mxu0
  %908 = vdwg.mxu0
  %909 = vmatprep.subr.bf16.mxu0 0
  %910 = vmatpush1.bf16.msra.mxu0 %v347
  %911 = vmatprep.subr.bf16.mxu0 0
  %912 = vmatpush1.bf16.msra.mxu0 %v348
  %913 = vmatprep.subr.bf16.mxu0 0
  %914 = vmatpush1.bf16.msra.mxu0 %v349
  %915 = vmatprep.subr.bf16.mxu0 0
  %916 = vmatpush1.bf16.msra.mxu0 %v350
  %917 = vmatprep.subr.bf16.mxu0 0
  %918 = vmatpush1.bf16.msra.mxu0 %v351
  %919 = vmatprep.subr.bf16.mxu0 0
  %920 = vmatpush1.bf16.msra.mxu0 %v352
  %921 = vmatprep.subr.bf16.mxu0 0
  %922 = vmatpush1.bf16.msra.mxu0 %v353
  %923 = vmatprep.subr.bf16.mxu0 0
  %924 = vmatpush1.bf16.msra.mxu0 %v354
  %925 = vmatprep.subr.bf16.mxu0 0
  %926 = vmatpush1.bf16.msra.mxu0 0
  %927 = vmatprep.subr.bf16.mxu0 0
  %928 = vmatpush1.bf16.msra.mxu0 0
  %929 = vmatprep.subr.bf16.mxu0 0
  %930 = vmatpush1.bf16.msra.mxu0 0
  %931 = vmatprep.subr.bf16.mxu0 0
  %932 = vmatpush1.bf16.msra.mxu0 0
  %933 = vmatprep.subr.bf16.mxu0 0
  %934 = vmatpush1.bf16.msra.mxu0 0
  %935 = vmatprep.subr.bf16.mxu0 0
  %936 = vmatpush1.bf16.msra.mxu0 0
  %937 = vmatprep.subr.bf16.mxu0 0
  %938 = vmatpush1.bf16.msra.mxu0 0
  %939 = vmatprep.subr.bf16.mxu0 0
  %940 = vmatpush1.bf16.msra.mxu0 0
  %941 = vmatprep.mubr.bf16.mxu0 0
  %942 = vmatmul.mubr.bf16.gmra.mrb[0].mxu0 %v797
  %v943 = vpop.f32.mrb[0].mxu0
  %v944 = vadd.f32 0.0, %v943
  %v945 = vpop.f32.mrb[0].mxu0
  %v946 = vpop.f32.mrb[0].mxu0
  %v947 = vpop.f32.mrb[0].mxu0
  %948 = vdwg.mxu0
  %v949 = vadd.f32 %v904, %v944
  %v950 = vxor.u32 %v949, 2147483648
  %v951 = vmul.f32 %v950, 1.442695
  %v952 = vpow.pop %v951
  %v953 = vadd.f32 %v952, 1.0
  %v954 = vrcp.pop %v953
  %v955 = vmul.f32 1.0, %v954
  %v956 = vtanh.pop %v949
  %v957 = vmul.f32 %v955, %v785
  %959 = vrot.lane.b32.xlu0 %v956, 32
  %v960 = vpop.permute.xlu0 %959
  %v962 = vmul.f32 %v955, %v960
  %964 = vrot.lane.b32.xlu0 %v962, 32
  %v965 = vpop.permute.xlu0 %964
  %v967 = vadd.f32 %v957, %v965
  %v968 = vtanh.pop %v967
  %970 = vrot.lane.b32.xlu0 %v968, 32
  %v971 = vpop.permute.xlu0 %970
  %v973 = vmul.f32 %v955, %v971
  %975 = vrot.lane.b32.xlu0 %v973, 64
  %v976 = vpop.permute.xlu0 %975
  %v978 = vsel %vm218, %v976, 0.0
  %v979 = vpack.c.bf16 %v978, %v978
  %980 = vmatprep.subr.bf16.mxu0 0
  %981 = vmatpush1.bf16.msra.mxu0 %v133
  %982 = vmatprep.subr.bf16.mxu0 0
  %983 = vmatpush1.bf16.msra.mxu0 %v134
  %984 = vmatprep.subr.bf16.mxu0 0
  %985 = vmatpush1.bf16.msra.mxu0 %v135
  %986 = vmatprep.subr.bf16.mxu0 0
  %987 = vmatpush1.bf16.msra.mxu0 %v136
  %988 = vmatprep.subr.bf16.mxu0 0
  %989 = vmatpush1.bf16.msra.mxu0 %v137
  %990 = vmatprep.subr.bf16.mxu0 0
  %991 = vmatpush1.bf16.msra.mxu0 %v138
  %992 = vmatprep.subr.bf16.mxu0 0
  %993 = vmatpush1.bf16.msra.mxu0 %v139
  %994 = vmatprep.subr.bf16.mxu0 0
  %995 = vmatpush1.bf16.msra.mxu0 %v140
  %996 = vmatprep.subr.bf16.mxu0 0
  %997 = vmatpush1.bf16.msra.mxu0 0
  %998 = vmatprep.subr.bf16.mxu0 0
  %999 = vmatpush1.bf16.msra.mxu0 0
  %1000 = vmatprep.subr.bf16.mxu0 0
  %1001 = vmatpush1.bf16.msra.mxu0 0
  %1002 = vmatprep.subr.bf16.mxu0 0
  %1003 = vmatpush1.bf16.msra.mxu0 0
  %1004 = vmatprep.subr.bf16.mxu0 0
  %1005 = vmatpush1.bf16.msra.mxu0 0
  %1006 = vmatprep.subr.bf16.mxu0 0
  %1007 = vmatpush1.bf16.msra.mxu0 0
  %1008 = vmatprep.subr.bf16.mxu0 0
  %1009 = vmatpush1.bf16.msra.mxu0 0
  %1010 = vmatprep.subr.bf16.mxu0 0
  %1011 = vmatpush1.bf16.msra.mxu0 0
  %1012 = vmatprep.mubr.bf16.mxu0 0
  %1013 = vmatmul.mubr.bf16.gmra.mrb[0].mxu0 %v868
  %v1014 = vpop.f32.mrb[0].mxu0
  %v1015 = vadd.f32 0.0, %v1014
  %v1016 = vpop.f32.mrb[0].mxu0
  %v1017 = vpop.f32.mrb[0].mxu0
  %v1018 = vpop.f32.mrb[0].mxu0
  %1019 = vdwg.mxu0
  %v1020 = vadd.f32 %v31, %v1015
  %v1021 = vxor.u32 %v1020, 2147483648
  %v1022 = vmul.f32 %v1021, 1.442695
  %v1023 = vpow.pop %v1022
  %v1024 = vadd.f32 %v1023, 1.0
  %v1025 = vrcp.pop %v1024
  %v1026 = vmul.f32 1.0, %v1025
  %v1027 = vtanh.pop %v1020
  %v1028 = vmul.f32 %v1026, %v856
  %1030 = vrot.lane.b32.xlu0 %v1027, 32
  %v1031 = vpop.permute.xlu0 %1030
  %v1033 = vmul.f32 %v1026, %v1031
  %1035 = vrot.lane.b32.xlu0 %v1033, 32
  %v1036 = vpop.permute.xlu0 %1035
  %v1038 = vadd.f32 %v1028, %v1036
  %v1039 = vtanh.pop %v1038
  %1041 = vrot.lane.b32.xlu0 %v1039, 32
  %v1042 = vpop.permute.xlu0 %1041
  %v1044 = vmul.f32 %v1026, %v1042
  %1046 = vrot.lane.b32.xlu0 %v1044, 64
  %v1047 = vpop.permute.xlu0 %1046
  %v1049 = vsel %vm218, %v1047, 0.0
  %v1050 = vpack.c.bf16 %v1049, %v1049
  %1051 = vmatprep.subr.bf16.mxu0 0
  %1052 = vmatpush1.bf16.msra.mxu0 %v259
  %1053 = vmatprep.subr.bf16.mxu0 0
  %1054 = vmatpush1.bf16.msra.mxu0 %v260
  %1055 = vmatprep.subr.bf16.mxu0 0
  %1056 = vmatpush1.bf16.msra.mxu0 %v261
  %1057 = vmatprep.subr.bf16.mxu0 0
  %1058 = vmatpush1.bf16.msra.mxu0 %v262
  %1059 = vmatprep.subr.bf16.mxu0 0
  %1060 = vmatpush1.bf16.msra.mxu0 %v263
  %1061 = vmatprep.subr.bf16.mxu0 0
  %1062 = vmatpush1.bf16.msra.mxu0 %v264
  %1063 = vmatprep.subr.bf16.mxu0 0
  %1064 = vmatpush1.bf16.msra.mxu0 %v265
  %1065 = vmatprep.subr.bf16.mxu0 0
  %1066 = vmatpush1.bf16.msra.mxu0 %v266
  %1067 = vmatprep.subr.bf16.mxu0 0
  %1068 = vmatpush1.bf16.msra.mxu0 0
  %1069 = vmatprep.subr.bf16.mxu0 0
  %1070 = vmatpush1.bf16.msra.mxu0 0
  %1071 = vmatprep.subr.bf16.mxu0 0
  %1072 = vmatpush1.bf16.msra.mxu0 0
  %1073 = vmatprep.subr.bf16.mxu0 0
  %1074 = vmatpush1.bf16.msra.mxu0 0
  %1075 = vmatprep.subr.bf16.mxu0 0
  %1076 = vmatpush1.bf16.msra.mxu0 0
  %1077 = vmatprep.subr.bf16.mxu0 0
  %1078 = vmatpush1.bf16.msra.mxu0 0
  %1079 = vmatprep.subr.bf16.mxu0 0
  %1080 = vmatpush1.bf16.msra.mxu0 0
  %1081 = vmatprep.subr.bf16.mxu0 0
  %1082 = vmatpush1.bf16.msra.mxu0 0
  %1083 = vmatprep.mubr.bf16.mxu0 0
  %1084 = vmatmul.mubr.bf16.gmra.mrb[0].mxu0 %v1050
  %v1085 = vpop.f32.mrb[0].mxu0
  %v1086 = vadd.f32 %v225, %v1085
  %v1087 = vpop.f32.mrb[0].mxu0
  %v1088 = vpop.f32.mrb[0].mxu0
  %v1089 = vpop.f32.mrb[0].mxu0
  %1090 = vdwg.mxu0
  %1091 = vmatprep.subr.bf16.mxu0 0
  %1092 = vmatpush1.bf16.msra.mxu0 %v347
  %1093 = vmatprep.subr.bf16.mxu0 0
  %1094 = vmatpush1.bf16.msra.mxu0 %v348
  %1095 = vmatprep.subr.bf16.mxu0 0
  %1096 = vmatpush1.bf16.msra.mxu0 %v349
  %1097 = vmatprep.subr.bf16.mxu0 0
  %1098 = vmatpush1.bf16.msra.mxu0 %v350
  %1099 = vmatprep.subr.bf16.mxu0 0
  %1100 = vmatpush1.bf16.msra.mxu0 %v351
  %1101 = vmatprep.subr.bf16.mxu0 0
  %1102 = vmatpush1.bf16.msra.mxu0 %v352
  %1103 = vmatprep.subr.bf16.mxu0 0
  %1104 = vmatpush1.bf16.msra.mxu0 %v353
  %1105 = vmatprep.subr.bf16.mxu0 0
  %1106 = vmatpush1.bf16.msra.mxu0 %v354
  %1107 = vmatprep.subr.bf16.mxu0 0
  %1108 = vmatpush1.bf16.msra.mxu0 0
  %1109 = vmatprep.subr.bf16.mxu0 0
  %1110 = vmatpush1.bf16.msra.mxu0 0
  %1111 = vmatprep.subr.bf16.mxu0 0
  %1112 = vmatpush1.bf16.msra.mxu0 0
  %1113 = vmatprep.subr.bf16.mxu0 0
  %1114 = vmatpush1.bf16.msra.mxu0 0
  %1115 = vmatprep.subr.bf16.mxu0 0
  %1116 = vmatpush1.bf16.msra.mxu0 0
  %1117 = vmatprep.subr.bf16.mxu0 0
  %1118 = vmatpush1.bf16.msra.mxu0 0
  %1119 = vmatprep.subr.bf16.mxu0 0
  %1120 = vmatpush1.bf16.msra.mxu0 0
  %1121 = vmatprep.subr.bf16.mxu0 0
  %1122 = vmatpush1.bf16.msra.mxu0 0
  %1123 = vmatprep.mubr.bf16.mxu0 0
  %1124 = vmatmul.mubr.bf16.gmra.mrb[0].mxu0 %v979
  %v1125 = vpop.f32.mrb[0].mxu0
  %v1126 = vadd.f32 0.0, %v1125
  %v1127 = vpop.f32.mrb[0].mxu0
  %v1128 = vpop.f32.mrb[0].mxu0
  %v1129 = vpop.f32.mrb[0].mxu0
  %1130 = vdwg.mxu0
  %v1131 = vadd.f32 %v1086, %v1126
  %v1132 = vxor.u32 %v1131, 2147483648
  %v1133 = vmul.f32 %v1132, 1.442695
  %v1134 = vpow.pop %v1133
  %v1135 = vadd.f32 %v1134, 1.0
  %v1136 = vrcp.pop %v1135
  %v1137 = vmul.f32 1.0, %v1136
  %v1138 = vtanh.pop %v1131
  %v1139 = vmul.f32 %v1137, %v967
  %1141 = vrot.lane.b32.xlu0 %v1138, 32
  %v1142 = vpop.permute.xlu0 %1141
  %v1144 = vmul.f32 %v1137, %v1142
  %1146 = vrot.lane.b32.xlu0 %v1144, 32
  %v1147 = vpop.permute.xlu0 %1146
  %v1149 = vadd.f32 %v1139, %v1147
  %v1150 = vtanh.pop %v1149
  %1152 = vrot.lane.b32.xlu0 %v1150, 32
  %v1153 = vpop.permute.xlu0 %1152
  %v1155 = vmul.f32 %v1137, %v1153
  %1157 = vrot.lane.b32.xlu0 %v1155, 64
  %v1158 = vpop.permute.xlu0 %1157
  %v1160 = vsel %vm218, %v1158, 0.0
  %v1161 = vpack.c.bf16 %v1160, %v1160
  %1162 = vmatprep.subr.bf16.mxu0 0
  %1163 = vmatpush1.bf16.msra.mxu0 %v133
  %1164 = vmatprep.subr.bf16.mxu0 0
  %1165 = vmatpush1.bf16.msra.mxu0 %v134
  %1166 = vmatprep.subr.bf16.mxu0 0
  %1167 = vmatpush1.bf16.msra.mxu0 %v135
  %1168 = vmatprep.subr.bf16.mxu0 0
  %1169 = vmatpush1.bf16.msra.mxu0 %v136
  %1170 = vmatprep.subr.bf16.mxu0 0
  %1171 = vmatpush1.bf16.msra.mxu0 %v137
  %1172 = vmatprep.subr.bf16.mxu0 0
  %1173 = vmatpush1.bf16.msra.mxu0 %v138
  %1174 = vmatprep.subr.bf16.mxu0 0
  %1175 = vmatpush1.bf16.msra.mxu0 %v139
  %1176 = vmatprep.subr.bf16.mxu0 0
  %1177 = vmatpush1.bf16.msra.mxu0 %v140
  %1178 = vmatprep.subr.bf16.mxu0 0
  %1179 = vmatpush1.bf16.msra.mxu0 0
  %1180 = vmatprep.subr.bf16.mxu0 0
  %1181 = vmatpush1.bf16.msra.mxu0 0
  %1182 = vmatprep.subr.bf16.mxu0 0
  %1183 = vmatpush1.bf16.msra.mxu0 0
  %1184 = vmatprep.subr.bf16.mxu0 0
  %1185 = vmatpush1.bf16.msra.mxu0 0
  %1186 = vmatprep.subr.bf16.mxu0 0
  %1187 = vmatpush1.bf16.msra.mxu0 0
  %1188 = vmatprep.subr.bf16.mxu0 0
  %1189 = vmatpush1.bf16.msra.mxu0 0
  %1190 = vmatprep.subr.bf16.mxu0 0
  %1191 = vmatpush1.bf16.msra.mxu0 0
  %1192 = vmatprep.subr.bf16.mxu0 0
  %1193 = vmatpush1.bf16.msra.mxu0 0
  %1194 = vmatprep.mubr.bf16.mxu0 0
  %1195 = vmatmul.mubr.bf16.gmra.mrb[0].mxu0 %v1050
  %v1196 = vpop.f32.mrb[0].mxu0
  %v1197 = vadd.f32 0.0, %v1196
  %v1198 = vpop.f32.mrb[0].mxu0
  %v1199 = vpop.f32.mrb[0].mxu0
  %v1200 = vpop.f32.mrb[0].mxu0
  %1201 = vdwg.mxu0
  %v1202 = vadd.f32 %v32, %v1197
  %v1203 = vxor.u32 %v1202, 2147483648
  %v1204 = vmul.f32 %v1203, 1.442695
  %v1205 = vpow.pop %v1204
  %v1206 = vadd.f32 %v1205, 1.0
  %v1207 = vrcp.pop %v1206
  %v1208 = vmul.f32 1.0, %v1207
  %v1209 = vtanh.pop %v1202
  %v1210 = vmul.f32 %v1208, %v1038
  %1212 = vrot.lane.b32.xlu0 %v1209, 32
  %v1213 = vpop.permute.xlu0 %1212
  %v1215 = vmul.f32 %v1208, %v1213
  %1217 = vrot.lane.b32.xlu0 %v1215, 32
  %v1218 = vpop.permute.xlu0 %1217
  %v1220 = vadd.f32 %v1210, %v1218
  %v1221 = vtanh.pop %v1220
  %1223 = vrot.lane.b32.xlu0 %v1221, 32
  %v1224 = vpop.permute.xlu0 %1223
  %v1226 = vmul.f32 %v1208, %v1224
  %1228 = vrot.lane.b32.xlu0 %v1226, 64
  %v1229 = vpop.permute.xlu0 %1228
  %v1231 = vsel %vm218, %v1229, 0.0
  %v1232 = vpack.c.bf16 %v1231, %v1231
  %1233 = vmatprep.subr.bf16.mxu0 0
  %1234 = vmatpush1.bf16.msra.mxu0 %v259
  %1235 = vmatprep.subr.bf16.mxu0 0
  %1236 = vmatpush1.bf16.msra.mxu0 %v260
  %1237 = vmatprep.subr.bf16.mxu0 0
  %1238 = vmatpush1.bf16.msra.mxu0 %v261
  %1239 = vmatprep.subr.bf16.mxu0 0
  %1240 = vmatpush1.bf16.msra.mxu0 %v262
  %1241 = vmatprep.subr.bf16.mxu0 0
  %1242 = vmatpush1.bf16.msra.mxu0 %v263
  %1243 = vmatprep.subr.bf16.mxu0 0
  %1244 = vmatpush1.bf16.msra.mxu0 %v264
  %1245 = vmatprep.subr.bf16.mxu0 0
  %1246 = vmatpush1.bf16.msra.mxu0 %v265
  %1247 = vmatprep.subr.bf16.mxu0 0
  %1248 = vmatpush1.bf16.msra.mxu0 %v266
  %1249 = vmatprep.subr.bf16.mxu0 0
  %1250 = vmatpush1.bf16.msra.mxu0 0
  %1251 = vmatprep.subr.bf16.mxu0 0
  %1252 = vmatpush1.bf16.msra.mxu0 0
  %1253 = vmatprep.subr.bf16.mxu0 0
  %1254 = vmatpush1.bf16.msra.mxu0 0
  %1255 = vmatprep.subr.bf16.mxu0 0
  %1256 = vmatpush1.bf16.msra.mxu0 0
  %1257 = vmatprep.subr.bf16.mxu0 0
  %1258 = vmatpush1.bf16.msra.mxu0 0
  %1259 = vmatprep.subr.bf16.mxu0 0
  %1260 = vmatpush1.bf16.msra.mxu0 0
  %1261 = vmatprep.subr.bf16.mxu0 0
  %1262 = vmatpush1.bf16.msra.mxu0 0
  %1263 = vmatprep.subr.bf16.mxu0 0
  %1264 = vmatpush1.bf16.msra.mxu0 0
  %1265 = vmatprep.mubr.bf16.mxu0 0
  %1266 = vmatmul.mubr.bf16.gmra.mrb[0].mxu0 %v1232
  %v1267 = vpop.f32.mrb[0].mxu0
  %v1268 = vadd.f32 %v225, %v1267
  %v1269 = vpop.f32.mrb[0].mxu0
  %v1270 = vpop.f32.mrb[0].mxu0
  %v1271 = vpop.f32.mrb[0].mxu0
  %1272 = vdwg.mxu0
  %1273 = vmatprep.subr.bf16.mxu0 0
  %1274 = vmatpush1.bf16.msra.mxu0 %v347
  %1275 = vmatprep.subr.bf16.mxu0 0
  %1276 = vmatpush1.bf16.msra.mxu0 %v348
  %1277 = vmatprep.subr.bf16.mxu0 0
  %1278 = vmatpush1.bf16.msra.mxu0 %v349
  %1279 = vmatprep.subr.bf16.mxu0 0
  %1280 = vmatpush1.bf16.msra.mxu0 %v350
  %1281 = vmatprep.subr.bf16.mxu0 0
  %1282 = vmatpush1.bf16.msra.mxu0 %v351
  %1283 = vmatprep.subr.bf16.mxu0 0
  %1284 = vmatpush1.bf16.msra.mxu0 %v352
  %1285 = vmatprep.subr.bf16.mxu0 0
  %1286 = vmatpush1.bf16.msra.mxu0 %v353
  %1287 = vmatprep.subr.bf16.mxu0 0
  %1288 = vmatpush1.bf16.msra.mxu0 %v354
  %1289 = vmatprep.subr.bf16.mxu0 0
  %1290 = vmatpush1.bf16.msra.mxu0 0
  %1291 = vmatprep.subr.bf16.mxu0 0
  %1292 = vmatpush1.bf16.msra.mxu0 0
  %1293 = vmatprep.subr.bf16.mxu0 0
  %1294 = vmatpush1.bf16.msra.mxu0 0
  %1295 = vmatprep.subr.bf16.mxu0 0
  %1296 = vmatpush1.bf16.msra.mxu0 0
  %1297 = vmatprep.subr.bf16.mxu0 0
  %1298 = vmatpush1.bf16.msra.mxu0 0
  %1299 = vmatprep.subr.bf16.mxu0 0
  %1300 = vmatpush1.bf16.msra.mxu0 0
  %1301 = vmatprep.subr.bf16.mxu0 0
  %1302 = vmatpush1.bf16.msra.mxu0 0
  %1303 = vmatprep.subr.bf16.mxu0 0
  %1304 = vmatpush1.bf16.msra.mxu0 0
  %1305 = vmatprep.mubr.bf16.mxu0 0
  %1306 = vmatmul.mubr.bf16.gmra.mrb[0].mxu0 %v1161
  %v1307 = vpop.f32.mrb[0].mxu0
  %v1308 = vadd.f32 0.0, %v1307
  %v1309 = vpop.f32.mrb[0].mxu0
  %v1310 = vpop.f32.mrb[0].mxu0
  %v1311 = vpop.f32.mrb[0].mxu0
  %1312 = vdwg.mxu0
  %v1313 = vadd.f32 %v1268, %v1308
  %v1314 = vxor.u32 %v1313, 2147483648
  %v1315 = vmul.f32 %v1314, 1.442695
  %v1316 = vpow.pop %v1315
  %v1317 = vadd.f32 %v1316, 1.0
  %v1318 = vrcp.pop %v1317
  %v1319 = vmul.f32 1.0, %v1318
  %v1320 = vtanh.pop %v1313
  %v1321 = vmul.f32 %v1319, %v1149
  %1323 = vrot.lane.b32.xlu0 %v1320, 32
  %v1324 = vpop.permute.xlu0 %1323
  %v1326 = vmul.f32 %v1319, %v1324
  %1328 = vrot.lane.b32.xlu0 %v1326, 32
  %v1329 = vpop.permute.xlu0 %1328
  %v1331 = vadd.f32 %v1321, %v1329
  %v1332 = vtanh.pop %v1331
  %1334 = vrot.lane.b32.xlu0 %v1332, 32
  %v1335 = vpop.permute.xlu0 %1334
  %v1337 = vmul.f32 %v1319, %v1335
  %1339 = vrot.lane.b32.xlu0 %v1337, 64
  %v1340 = vpop.permute.xlu0 %1339
  %v1342 = vsel %vm218, %v1340, 0.0
  %v1343 = vpack.c.bf16 %v1342, %v1342
  %1344 = vmatprep.subr.bf16.mxu0 0
  %1345 = vmatpush1.bf16.msra.mxu0 %v133
  %1346 = vmatprep.subr.bf16.mxu0 0
  %1347 = vmatpush1.bf16.msra.mxu0 %v134
  %1348 = vmatprep.subr.bf16.mxu0 0
  %1349 = vmatpush1.bf16.msra.mxu0 %v135
  %1350 = vmatprep.subr.bf16.mxu0 0
  %1351 = vmatpush1.bf16.msra.mxu0 %v136
  %1352 = vmatprep.subr.bf16.mxu0 0
  %1353 = vmatpush1.bf16.msra.mxu0 %v137
  %1354 = vmatprep.subr.bf16.mxu0 0
  %1355 = vmatpush1.bf16.msra.mxu0 %v138
  %1356 = vmatprep.subr.bf16.mxu0 0
  %1357 = vmatpush1.bf16.msra.mxu0 %v139
  %1358 = vmatprep.subr.bf16.mxu0 0
  %1359 = vmatpush1.bf16.msra.mxu0 %v140
  %1360 = vmatprep.subr.bf16.mxu0 0
  %1361 = vmatpush1.bf16.msra.mxu0 0
  %1362 = vmatprep.subr.bf16.mxu0 0
  %1363 = vmatpush1.bf16.msra.mxu0 0
  %1364 = vmatprep.subr.bf16.mxu0 0
  %1365 = vmatpush1.bf16.msra.mxu0 0
  %1366 = vmatprep.subr.bf16.mxu0 0
  %1367 = vmatpush1.bf16.msra.mxu0 0
  %1368 = vmatprep.subr.bf16.mxu0 0
  %1369 = vmatpush1.bf16.msra.mxu0 0
  %1370 = vmatprep.subr.bf16.mxu0 0
  %1371 = vmatpush1.bf16.msra.mxu0 0
  %1372 = vmatprep.subr.bf16.mxu0 0
  %1373 = vmatpush1.bf16.msra.mxu0 0
  %1374 = vmatprep.subr.bf16.mxu0 0
  %1375 = vmatpush1.bf16.msra.mxu0 0
  %1376 = vmatprep.mubr.bf16.mxu0 0
  %1377 = vmatmul.mubr.bf16.gmra.mrb[0].mxu0 %v1232
  %v1378 = vpop.f32.mrb[0].mxu0
  %v1379 = vadd.f32 0.0, %v1378
  %v1380 = vpop.f32.mrb[0].mxu0
  %v1381 = vpop.f32.mrb[0].mxu0
  %v1382 = vpop.f32.mrb[0].mxu0
  %1383 = vdwg.mxu0
  %v1384 = vadd.f32 %v33, %v1379
  %v1385 = vxor.u32 %v1384, 2147483648
  %v1386 = vmul.f32 %v1385, 1.442695
  %v1387 = vpow.pop %v1386
  %v1388 = vadd.f32 %v1387, 1.0
  %v1389 = vrcp.pop %v1388
  %v1390 = vmul.f32 1.0, %v1389
  %v1391 = vtanh.pop %v1384
  %v1392 = vmul.f32 %v1390, %v1220
  %1394 = vrot.lane.b32.xlu0 %v1391, 32
  %v1395 = vpop.permute.xlu0 %1394
  %v1397 = vmul.f32 %v1390, %v1395
  %1399 = vrot.lane.b32.xlu0 %v1397, 32
  %v1400 = vpop.permute.xlu0 %1399
  %v1402 = vadd.f32 %v1392, %v1400
  %v1403 = vtanh.pop %v1402
  %1405 = vrot.lane.b32.xlu0 %v1403, 32
  %v1406 = vpop.permute.xlu0 %1405
  %v1408 = vmul.f32 %v1390, %v1406
  %1410 = vrot.lane.b32.xlu0 %v1408, 64
  %v1411 = vpop.permute.xlu0 %1410
  %v1413 = vsel %vm218, %v1411, 0.0
  %v1414 = vpack.c.bf16 %v1413, %v1413
  %1415 = vmatprep.subr.bf16.mxu0 0
  %1416 = vmatpush1.bf16.msra.mxu0 %v259
  %1417 = vmatprep.subr.bf16.mxu0 0
  %1418 = vmatpush1.bf16.msra.mxu0 %v260
  %1419 = vmatprep.subr.bf16.mxu0 0
  %1420 = vmatpush1.bf16.msra.mxu0 %v261
  %1421 = vmatprep.subr.bf16.mxu0 0
  %1422 = vmatpush1.bf16.msra.mxu0 %v262
  %1423 = vmatprep.subr.bf16.mxu0 0
  %1424 = vmatpush1.bf16.msra.mxu0 %v263
  %1425 = vmatprep.subr.bf16.mxu0 0
  %1426 = vmatpush1.bf16.msra.mxu0 %v264
  %1427 = vmatprep.subr.bf16.mxu0 0
  %1428 = vmatpush1.bf16.msra.mxu0 %v265
  %1429 = vmatprep.subr.bf16.mxu0 0
  %1430 = vmatpush1.bf16.msra.mxu0 %v266
  %1431 = vmatprep.subr.bf16.mxu0 0
  %1432 = vmatpush1.bf16.msra.mxu0 0
  %1433 = vmatprep.subr.bf16.mxu0 0
  %1434 = vmatpush1.bf16.msra.mxu0 0
  %1435 = vmatprep.subr.bf16.mxu0 0
  %1436 = vmatpush1.bf16.msra.mxu0 0
  %1437 = vmatprep.subr.bf16.mxu0 0
  %1438 = vmatpush1.bf16.msra.mxu0 0
  %1439 = vmatprep.subr.bf16.mxu0 0
  %1440 = vmatpush1.bf16.msra.mxu0 0
  %1441 = vmatprep.subr.bf16.mxu0 0
  %1442 = vmatpush1.bf16.msra.mxu0 0
  %1443 = vmatprep.subr.bf16.mxu0 0
  %1444 = vmatpush1.bf16.msra.mxu0 0
  %1445 = vmatprep.subr.bf16.mxu0 0
  %1446 = vmatpush1.bf16.msra.mxu0 0
  %1447 = vmatprep.mubr.bf16.mxu0 0
  %1448 = vmatmul.mubr.bf16.gmra.mrb[0].mxu0 %v1414
  %v1449 = vpop.f32.mrb[0].mxu0
  %v1450 = vadd.f32 %v225, %v1449
  %v1451 = vpop.f32.mrb[0].mxu0
  %v1452 = vpop.f32.mrb[0].mxu0
  %v1453 = vpop.f32.mrb[0].mxu0
  %1454 = vdwg.mxu0
  %1455 = vmatprep.subr.bf16.mxu0 0
  %1456 = vmatpush1.bf16.msra.mxu0 %v347
  %1457 = vmatprep.subr.bf16.mxu0 0
  %1458 = vmatpush1.bf16.msra.mxu0 %v348
  %1459 = vmatprep.subr.bf16.mxu0 0
  %1460 = vmatpush1.bf16.msra.mxu0 %v349
  %1461 = vmatprep.subr.bf16.mxu0 0
  %1462 = vmatpush1.bf16.msra.mxu0 %v350
  %1463 = vmatprep.subr.bf16.mxu0 0
  %1464 = vmatpush1.bf16.msra.mxu0 %v351
  %1465 = vmatprep.subr.bf16.mxu0 0
  %1466 = vmatpush1.bf16.msra.mxu0 %v352
  %1467 = vmatprep.subr.bf16.mxu0 0
  %1468 = vmatpush1.bf16.msra.mxu0 %v353
  %1469 = vmatprep.subr.bf16.mxu0 0
  %1470 = vmatpush1.bf16.msra.mxu0 %v354
  %1471 = vmatprep.subr.bf16.mxu0 0
  %1472 = vmatpush1.bf16.msra.mxu0 0
  %1473 = vmatprep.subr.bf16.mxu0 0
  %1474 = vmatpush1.bf16.msra.mxu0 0
  %1475 = vmatprep.subr.bf16.mxu0 0
  %1476 = vmatpush1.bf16.msra.mxu0 0
  %1477 = vmatprep.subr.bf16.mxu0 0
  %1478 = vmatpush1.bf16.msra.mxu0 0
  %1479 = vmatprep.subr.bf16.mxu0 0
  %1480 = vmatpush1.bf16.msra.mxu0 0
  %1481 = vmatprep.subr.bf16.mxu0 0
  %1482 = vmatpush1.bf16.msra.mxu0 0
  %1483 = vmatprep.subr.bf16.mxu0 0
  %1484 = vmatpush1.bf16.msra.mxu0 0
  %1485 = vmatprep.subr.bf16.mxu0 0
  %1486 = vmatpush1.bf16.msra.mxu0 0
  %1487 = vmatprep.mubr.bf16.mxu0 0
  %1488 = vmatmul.mubr.bf16.gmra.mrb[0].mxu0 %v1343
  %v1489 = vpop.f32.mrb[0].mxu0
  %v1490 = vadd.f32 0.0, %v1489
  %v1491 = vpop.f32.mrb[0].mxu0
  %v1492 = vpop.f32.mrb[0].mxu0
  %v1493 = vpop.f32.mrb[0].mxu0
  %1494 = vdwg.mxu0
  %v1495 = vadd.f32 %v1450, %v1490
  %v1496 = vxor.u32 %v1495, 2147483648
  %v1497 = vmul.f32 %v1496, 1.442695
  %v1498 = vpow.pop %v1497
  %v1499 = vadd.f32 %v1498, 1.0
  %v1500 = vrcp.pop %v1499
  %v1501 = vmul.f32 1.0, %v1500
  %v1502 = vtanh.pop %v1495
  %v1503 = vmul.f32 %v1501, %v1331
  %1505 = vrot.lane.b32.xlu0 %v1502, 32
  %v1506 = vpop.permute.xlu0 %1505
  %v1508 = vmul.f32 %v1501, %v1506
  %1510 = vrot.lane.b32.xlu0 %v1508, 32
  %v1511 = vpop.permute.xlu0 %1510
  %v1513 = vadd.f32 %v1503, %v1511
  %v1514 = vtanh.pop %v1513
  %1516 = vrot.lane.b32.xlu0 %v1514, 32
  %v1517 = vpop.permute.xlu0 %1516
  %v1519 = vmul.f32 %v1501, %v1517
  %1521 = vrot.lane.b32.xlu0 %v1519, 64
  %v1522 = vpop.permute.xlu0 %1521
  %v1524 = vsel %vm218, %v1522, 0.0
  %v1525 = vpack.c.bf16 %v1524, %v1524
  %1526 = vmatprep.subr.bf16.mxu0 0
  %1527 = vmatpush1.bf16.msra.mxu0 %v133
  %1528 = vmatprep.subr.bf16.mxu0 0
  %1529 = vmatpush1.bf16.msra.mxu0 %v134
  %1530 = vmatprep.subr.bf16.mxu0 0
  %1531 = vmatpush1.bf16.msra.mxu0 %v135
  %1532 = vmatprep.subr.bf16.mxu0 0
  %1533 = vmatpush1.bf16.msra.mxu0 %v136
  %1534 = vmatprep.subr.bf16.mxu0 0
  %1535 = vmatpush1.bf16.msra.mxu0 %v137
  %1536 = vmatprep.subr.bf16.mxu0 0
  %1537 = vmatpush1.bf16.msra.mxu0 %v138
  %1538 = vmatprep.subr.bf16.mxu0 0
  %1539 = vmatpush1.bf16.msra.mxu0 %v139
  %1540 = vmatprep.subr.bf16.mxu0 0
  %1541 = vmatpush1.bf16.msra.mxu0 %v140
  %1542 = vmatprep.subr.bf16.mxu0 0
  %1543 = vmatpush1.bf16.msra.mxu0 0
  %1544 = vmatprep.subr.bf16.mxu0 0
  %1545 = vmatpush1.bf16.msra.mxu0 0
  %1546 = vmatprep.subr.bf16.mxu0 0
  %1547 = vmatpush1.bf16.msra.mxu0 0
  %1548 = vmatprep.subr.bf16.mxu0 0
  %1549 = vmatpush1.bf16.msra.mxu0 0
  %1550 = vmatprep.subr.bf16.mxu0 0
  %1551 = vmatpush1.bf16.msra.mxu0 0
  %1552 = vmatprep.subr.bf16.mxu0 0
  %1553 = vmatpush1.bf16.msra.mxu0 0
  %1554 = vmatprep.subr.bf16.mxu0 0
  %1555 = vmatpush1.bf16.msra.mxu0 0
  %1556 = vmatprep.subr.bf16.mxu0 0
  %1557 = vmatpush1.bf16.msra.mxu0 0
  %1558 = vmatprep.mubr.bf16.mxu0 0
  %1559 = vmatmul.mubr.bf16.gmra.mrb[0].mxu0 %v1414
  %v1560 = vpop.f32.mrb[0].mxu0
  %v1561 = vadd.f32 0.0, %v1560
  %v1562 = vpop.f32.mrb[0].mxu0
  %v1563 = vpop.f32.mrb[0].mxu0
  %v1564 = vpop.f32.mrb[0].mxu0
  %1565 = vdwg.mxu0
  %v1566 = vadd.f32 %v34, %v1561
  %v1567 = vxor.u32 %v1566, 2147483648
  %v1568 = vmul.f32 %v1567, 1.442695
  %v1569 = vpow.pop %v1568
  %v1570 = vadd.f32 %v1569, 1.0
  %v1571 = vrcp.pop %v1570
  %v1572 = vmul.f32 1.0, %v1571
  %v1573 = vtanh.pop %v1566
  %v1574 = vmul.f32 %v1572, %v1402
  %1576 = vrot.lane.b32.xlu0 %v1573, 32
  %v1577 = vpop.permute.xlu0 %1576
  %v1579 = vmul.f32 %v1572, %v1577
  %1581 = vrot.lane.b32.xlu0 %v1579, 32
  %v1582 = vpop.permute.xlu0 %1581
  %v1584 = vadd.f32 %v1574, %v1582
  %v1585 = vtanh.pop %v1584
  %1587 = vrot.lane.b32.xlu0 %v1585, 32
  %v1588 = vpop.permute.xlu0 %1587
  %v1590 = vmul.f32 %v1572, %v1588
  %1592 = vrot.lane.b32.xlu0 %v1590, 64
  %v1593 = vpop.permute.xlu0 %1592
  %v1595 = vsel %vm218, %v1593, 0.0
  %v1596 = vpack.c.bf16 %v1595, %v1595
  %1597 = vmatprep.subr.bf16.mxu0 0
  %1598 = vmatpush1.bf16.msra.mxu0 %v259
  %1599 = vmatprep.subr.bf16.mxu0 0
  %1600 = vmatpush1.bf16.msra.mxu0 %v260
  %1601 = vmatprep.subr.bf16.mxu0 0
  %1602 = vmatpush1.bf16.msra.mxu0 %v261
  %1603 = vmatprep.subr.bf16.mxu0 0
  %1604 = vmatpush1.bf16.msra.mxu0 %v262
  %1605 = vmatprep.subr.bf16.mxu0 0
  %1606 = vmatpush1.bf16.msra.mxu0 %v263
  %1607 = vmatprep.subr.bf16.mxu0 0
  %1608 = vmatpush1.bf16.msra.mxu0 %v264
  %1609 = vmatprep.subr.bf16.mxu0 0
  %1610 = vmatpush1.bf16.msra.mxu0 %v265
  %1611 = vmatprep.subr.bf16.mxu0 0
  %1612 = vmatpush1.bf16.msra.mxu0 %v266
  %1613 = vmatprep.subr.bf16.mxu0 0
  %1614 = vmatpush1.bf16.msra.mxu0 0
  %1615 = vmatprep.subr.bf16.mxu0 0
  %1616 = vmatpush1.bf16.msra.mxu0 0
  %1617 = vmatprep.subr.bf16.mxu0 0
  %1618 = vmatpush1.bf16.msra.mxu0 0
  %1619 = vmatprep.subr.bf16.mxu0 0
  %1620 = vmatpush1.bf16.msra.mxu0 0
  %1621 = vmatprep.subr.bf16.mxu0 0
  %1622 = vmatpush1.bf16.msra.mxu0 0
  %1623 = vmatprep.subr.bf16.mxu0 0
  %1624 = vmatpush1.bf16.msra.mxu0 0
  %1625 = vmatprep.subr.bf16.mxu0 0
  %1626 = vmatpush1.bf16.msra.mxu0 0
  %1627 = vmatprep.subr.bf16.mxu0 0
  %1628 = vmatpush1.bf16.msra.mxu0 0
  %1629 = vmatprep.mubr.bf16.mxu0 0
  %1630 = vmatmul.mubr.bf16.gmra.mrb[0].mxu0 %v1596
  %v1631 = vpop.f32.mrb[0].mxu0
  %v1632 = vadd.f32 %v225, %v1631
  %v1633 = vpop.f32.mrb[0].mxu0
  %v1634 = vpop.f32.mrb[0].mxu0
  %v1635 = vpop.f32.mrb[0].mxu0
  %1636 = vdwg.mxu0
  %1637 = vmatprep.subr.bf16.mxu0 0
  %1638 = vmatpush1.bf16.msra.mxu0 %v347
  %1639 = vmatprep.subr.bf16.mxu0 0
  %1640 = vmatpush1.bf16.msra.mxu0 %v348
  %1641 = vmatprep.subr.bf16.mxu0 0
  %1642 = vmatpush1.bf16.msra.mxu0 %v349
  %1643 = vmatprep.subr.bf16.mxu0 0
  %1644 = vmatpush1.bf16.msra.mxu0 %v350
  %1645 = vmatprep.subr.bf16.mxu0 0
  %1646 = vmatpush1.bf16.msra.mxu0 %v351
  %1647 = vmatprep.subr.bf16.mxu0 0
  %1648 = vmatpush1.bf16.msra.mxu0 %v352
  %1649 = vmatprep.subr.bf16.mxu0 0
  %1650 = vmatpush1.bf16.msra.mxu0 %v353
  %1651 = vmatprep.subr.bf16.mxu0 0
  %1652 = vmatpush1.bf16.msra.mxu0 %v354
  %1653 = vmatprep.subr.bf16.mxu0 0
  %1654 = vmatpush1.bf16.msra.mxu0 0
  %1655 = vmatprep.subr.bf16.mxu0 0
  %1656 = vmatpush1.bf16.msra.mxu0 0
  %1657 = vmatprep.subr.bf16.mxu0 0
  %1658 = vmatpush1.bf16.msra.mxu0 0
  %1659 = vmatprep.subr.bf16.mxu0 0
  %1660 = vmatpush1.bf16.msra.mxu0 0
  %1661 = vmatprep.subr.bf16.mxu0 0
  %1662 = vmatpush1.bf16.msra.mxu0 0
  %1663 = vmatprep.subr.bf16.mxu0 0
  %1664 = vmatpush1.bf16.msra.mxu0 0
  %1665 = vmatprep.subr.bf16.mxu0 0
  %1666 = vmatpush1.bf16.msra.mxu0 0
  %1667 = vmatprep.subr.bf16.mxu0 0
  %1668 = vmatpush1.bf16.msra.mxu0 0
  %1669 = vmatprep.mubr.bf16.mxu0 0
  %1670 = vmatmul.mubr.bf16.gmra.mrb[0].mxu0 %v1525
  %v1671 = vpop.f32.mrb[0].mxu0
  %v1672 = vadd.f32 0.0, %v1671
  %v1673 = vpop.f32.mrb[0].mxu0
  %v1674 = vpop.f32.mrb[0].mxu0
  %v1675 = vpop.f32.mrb[0].mxu0
  %1676 = vdwg.mxu0
  %v1677 = vadd.f32 %v1632, %v1672
  %v1678 = vxor.u32 %v1677, 2147483648
  %v1679 = vmul.f32 %v1678, 1.442695
  %v1680 = vpow.pop %v1679
  %v1681 = vadd.f32 %v1680, 1.0
  %v1682 = vrcp.pop %v1681
  %v1683 = vmul.f32 1.0, %v1682
  %v1684 = vtanh.pop %v1677
  %v1685 = vmul.f32 %v1683, %v1513
  %1687 = vrot.lane.b32.xlu0 %v1684, 32
  %v1688 = vpop.permute.xlu0 %1687
  %v1690 = vmul.f32 %v1683, %v1688
  %1692 = vrot.lane.b32.xlu0 %v1690, 32
  %v1693 = vpop.permute.xlu0 %1692
  %v1695 = vadd.f32 %v1685, %v1693
  %v1696 = vtanh.pop %v1695
  %1698 = vrot.lane.b32.xlu0 %v1696, 32
  %v1699 = vpop.permute.xlu0 %1698
  %v1701 = vmul.f32 %v1683, %v1699
  %1703 = vrot.lane.b32.xlu0 %v1701, 64
  %v1704 = vpop.permute.xlu0 %1703
  %v1706 = vsel %vm218, %v1704, 0.0
  %v1707 = vpack.c.bf16 %v614, %v432
  %v1708 = vpack.c.bf16 %v978, %v796
  %v1709 = vpack.c.bf16 %v1342, %v1160
  %v1710 = vpack.c.bf16 %v1706, %v1524
  %v1712 = vlaneseq
  %v1713 = vshrl.u32 %v1712, 7
  %v1714 = vsub.s32 0, %v1713
  %v1715 = vrot.slane %v100, %v1714
  %v1733 = vunpack.c.l.b16 %v84
  %v1734 = vunpack.c.l.b16 %v85
  %v1735 = vunpack.c.l.b16 %v86
  %v1736 = vunpack.c.l.b16 %v87
  %v1737 = vunpack.c.l.b16 %v88
  %v1738 = vunpack.c.l.b16 %v89
  %v1739 = vunpack.c.l.b16 %v90
  %v1740 = vunpack.c.l.b16 %v91
  %v1741 = vunpack.c.l.b16 %v92
  %v1742 = vunpack.c.l.b16 %v93
  %v1743 = vunpack.c.l.b16 %v94
  %v1744 = vunpack.c.l.b16 %v95
  %v1745 = vunpack.c.l.b16 %v96
  %v1746 = vunpack.c.l.b16 %v97
  %v1747 = vunpack.c.l.b16 %v98
  %v1748 = vunpack.c.l.b16 %v99
  %v1749 = vpack.c.b16 %v1734, %v1733
  %v1750 = vpack.c.b16 %v1736, %v1735
  %v1751 = vpack.c.b16 %v1738, %v1737
  %v1752 = vpack.c.b16 %v1740, %v1739
  %v1753 = vpack.c.b16 %v1742, %v1741
  %v1754 = vpack.c.b16 %v1744, %v1743
  %v1755 = vpack.c.b16 %v1746, %v1745
  %v1756 = vpack.c.b16 %v1748, %v1747
  %1765 = vmatprep.subr.bf16.mxu0 0
  %1766 = vmatpush1.bf16.msra.mxu0 %v1749
  %1767 = vmatprep.subr.bf16.mxu0 0
  %1768 = vmatpush1.bf16.msra.mxu0 %v1750
  %1769 = vmatprep.subr.bf16.mxu0 0
  %1770 = vmatpush1.bf16.msra.mxu0 %v1751
  %1771 = vmatprep.subr.bf16.mxu0 0
  %1772 = vmatpush1.bf16.msra.mxu0 %v1752
  %1773 = vmatprep.subr.bf16.mxu0 0
  %1774 = vmatpush1.bf16.msra.mxu0 %v1753
  %1775 = vmatprep.subr.bf16.mxu0 0
  %1776 = vmatpush1.bf16.msra.mxu0 %v1754
  %1777 = vmatprep.subr.bf16.mxu0 0
  %1778 = vmatpush1.bf16.msra.mxu0 %v1755
  %1779 = vmatprep.subr.bf16.mxu0 0
  %1780 = vmatpush1.bf16.msra.mxu0 %v1756
  %1781 = vmatprep.subr.bf16.mxu0 0
  %1782 = vmatpush1.bf16.msra.mxu0 0
  %1783 = vmatprep.subr.bf16.mxu0 0
  %1784 = vmatpush1.bf16.msra.mxu0 0
  %1785 = vmatprep.subr.bf16.mxu0 0
  %1786 = vmatpush1.bf16.msra.mxu0 0
  %1787 = vmatprep.subr.bf16.mxu0 0
  %1788 = vmatpush1.bf16.msra.mxu0 0
  %1789 = vmatprep.subr.bf16.mxu0 0
  %1790 = vmatpush1.bf16.msra.mxu0 0
  %1791 = vmatprep.subr.bf16.mxu0 0
  %1792 = vmatpush1.bf16.msra.mxu0 0
  %1793 = vmatprep.subr.bf16.mxu0 0
  %1794 = vmatpush1.bf16.msra.mxu0 0
  %1795 = vmatprep.subr.bf16.mxu0 0
  %1796 = vmatpush1.bf16.msra.mxu0 0
  %1797 = vmatprep.mubr.bf16.mxu0 0
  %1798 = vmatmul.mubr.bf16.gmra.mrb[0].mxu0 %v1707
  %v1799 = vpop.f32.mrb[0].mxu0
  %v1800 = vadd.f32 %v1715, %v1799
  %v1801 = vpop.f32.mrb[0].mxu0
  %v1802 = vpop.f32.mrb[0].mxu0
  %v1803 = vadd.f32 %v1715, %v1802
  %v1804 = vpop.f32.mrb[0].mxu0
  %1805 = vmatprep.mubr.bf16.mxu0 0
  %1806 = vmatmul.mubr.bf16.gmra.mrb[0].mxu0 %v1708
  %v1807 = vpop.f32.mrb[0].mxu0
  %v1808 = vadd.f32 %v1715, %v1807
  %v1809 = vpop.f32.mrb[0].mxu0
  %v1810 = vpop.f32.mrb[0].mxu0
  %v1811 = vadd.f32 %v1715, %v1810
  %v1812 = vpop.f32.mrb[0].mxu0
  %1813 = vmatprep.mubr.bf16.mxu0 0
  %1814 = vmatmul.mubr.bf16.gmra.mrb[0].mxu0 %v1709
  %v1815 = vpop.f32.mrb[0].mxu0
  %v1816 = vadd.f32 %v1715, %v1815
  %v1817 = vpop.f32.mrb[0].mxu0
  %v1818 = vpop.f32.mrb[0].mxu0
  %v1819 = vadd.f32 %v1715, %v1818
  %v1820 = vpop.f32.mrb[0].mxu0
  %1821 = vmatprep.mubr.bf16.mxu0 0
  %1822 = vmatmul.mubr.bf16.gmra.mrb[0].mxu0 %v1710
  %v1823 = vpop.f32.mrb[0].mxu0
  %v1824 = vadd.f32 %v1715, %v1823
  %v1825 = vpop.f32.mrb[0].mxu0
  %v1826 = vpop.f32.mrb[0].mxu0
  %v1827 = vadd.f32 %v1715, %v1826
  %v1828 = vpop.f32.mrb[0].mxu0
  %1829 = vdwg.mxu0
  %1830 = vmax.xlane.f32.xlu0 %v1800
  %v1831 = vpop.xlane.xlu0 %1830
  %1832 = vmax.xlane.f32.xlu0 %v1803
  %v1833 = vpop.xlane.xlu0 %1832
  %1834 = vmax.xlane.f32.xlu0 %v1808
  %v1835 = vpop.xlane.xlu0 %1834
  %1836 = vmax.xlane.f32.xlu0 %v1811
  %v1837 = vpop.xlane.xlu0 %1836
  %1838 = vmax.xlane.f32.xlu0 %v1816
  %v1839 = vpop.xlane.xlu0 %1838
  %1840 = vmax.xlane.f32.xlu0 %v1819
  %v1841 = vpop.xlane.xlu0 %1840
  %1842 = vmax.xlane.f32.xlu0 %v1824
  %v1843 = vpop.xlane.xlu0 %1842
  %1844 = vmax.xlane.f32.xlu0 %v1827
  %v1845 = vpop.xlane.xlu0 %1844
  %v1846 = vsub.f32 %v1800, %v1831
  %v1847 = vsub.f32 %v1803, %v1833
  %v1848 = vsub.f32 %v1808, %v1835
  %v1849 = vsub.f32 %v1811, %v1837
  %v1850 = vsub.f32 %v1816, %v1839
  %v1851 = vsub.f32 %v1819, %v1841
  %v1852 = vsub.f32 %v1824, %v1843
  %v1853 = vsub.f32 %v1827, %v1845
  %v1854 = vmul.f32 %v1846, 1.442695
  %v1855 = vpow.pop %v1854
  %v1856 = vmul.f32 %v1847, 1.442695
  %v1857 = vpow.pop %v1856
  %v1858 = vmul.f32 %v1848, 1.442695
  %v1859 = vpow.pop %v1858
  %v1860 = vmul.f32 %v1849, 1.442695
  %v1861 = vpow.pop %v1860
  %v1862 = vmul.f32 %v1850, 1.442695
  %v1863 = vpow.pop %v1862
  %v1864 = vmul.f32 %v1851, 1.442695
  %v1865 = vpow.pop %v1864
  %v1866 = vmul.f32 %v1852, 1.442695
  %v1867 = vpow.pop %v1866
  %v1868 = vmul.f32 %v1853, 1.442695
  %v1869 = vpow.pop %v1868
  %1870 = vadd.xlane.f32.xlu0 %v1855
  %v1871 = vpop.xlane.xlu0 %1870
  %1872 = vadd.xlane.f32.xlu0 %v1857
  %v1873 = vpop.xlane.xlu0 %1872
  %1874 = vadd.xlane.f32.xlu0 %v1859
  %v1875 = vpop.xlane.xlu0 %1874
  %1876 = vadd.xlane.f32.xlu0 %v1861
  %v1877 = vpop.xlane.xlu0 %1876
  %1878 = vadd.xlane.f32.xlu0 %v1863
  %v1879 = vpop.xlane.xlu0 %1878
  %1880 = vadd.xlane.f32.xlu0 %v1865
  %v1881 = vpop.xlane.xlu0 %1880
  %1882 = vadd.xlane.f32.xlu0 %v1867
  %v1883 = vpop.xlane.xlu0 %1882
  %1884 = vadd.xlane.f32.xlu0 %v1869
  %v1885 = vpop.xlane.xlu0 %1884
  %v1886 = vlog2.pop %v1871
  %v1887 = vmul.f32 %v1886, 0.6931472
  %v1888 = vlog2.pop %v1873
  %v1889 = vmul.f32 %v1888, 0.6931472
  %v1890 = vlog2.pop %v1875
  %v1891 = vmul.f32 %v1890, 0.6931472
  %v1892 = vlog2.pop %v1877
  %v1893 = vmul.f32 %v1892, 0.6931472
  %v1894 = vlog2.pop %v1879
  %v1895 = vmul.f32 %v1894, 0.6931472
  %v1896 = vlog2.pop %v1881
  %v1897 = vmul.f32 %v1896, 0.6931472
  %v1898 = vlog2.pop %v1883
  %v1899 = vmul.f32 %v1898, 0.6931472
  %v1900 = vlog2.pop %v1885
  %v1901 = vmul.f32 %v1900, 0.6931472
  %v1902 = vsub.f32 %v1846, %v1887
  %v1903 = vsub.f32 %v1847, %v1889
  %v1904 = vsub.f32 %v1848, %v1891
  %v1905 = vsub.f32 %v1849, %v1893
  %v1906 = vsub.f32 %v1850, %v1895
  %v1907 = vsub.f32 %v1851, %v1897
  %v1908 = vsub.f32 %v1852, %v1899
  %v1909 = vsub.f32 %v1853, %v1901
  %1910 = vst [vmem:[%s7] sm:$0xff] %v1902
  %1911 = vst [vmem:[%s7 + $0x8] sm:$0xff] %v1903
  %1912 = vst [vmem:[%s7 + $0x10] sm:$0xff] %v1904
  %1913 = vst [vmem:[%s7 + $0x18] sm:$0xff] %v1905
  %1914 = vst [vmem:[%s7 + $0x20] sm:$0xff] %v1906
  %1915 = vst [vmem:[%s7 + $0x28] sm:$0xff] %v1907
  %1916 = vst [vmem:[%s7 + $0x30] sm:$0xff] %v1908
  %1917 = vst [vmem:[%s7 + $0x38] sm:$0xff] %v1909
  // Predicated region
  $region30: #{lstm_classifier_forward.1} parent=0 // pred_check
    _
  $region31: #{lstm_classifier_forward.1} parent=0 // pred_check_branch
    %1919 = sbr.rel (0) target = $region33
  $region32: #{lstm_classifier_forward.1} parent=0 // pred_region
    _
  $region33: #{lstm_classifier_forward.1} parent=0 // pred_fallthru
    _
  // Predicated region
  $region34: #{lstm_classifier_forward.1} parent=0 // pred_check
    _
  $region35: #{lstm_classifier_forward.1} parent=0 // pred_check_branch
    %1921 = sbr.rel (0) target = $region37
  $region36: #{lstm_classifier_forward.1} parent=0 // pred_region
    _
  $region37: #{lstm_classifier_forward.1} parent=0 // pred_fallthru
    _

</llo_original>
